<compile_context>
chip_gen: v7x
topology: tpu7x:2x2x1
jax: 0.10.0
libtpu: 0.0.40
codegen_flags: <defaults>
</compile_context>

<pallas_src>
import functools

import jax
import jax.numpy as jnp
from jax.experimental import pallas as pl
from jax.experimental.pallas import tpu as pltpu


# ----------------------------------------------------------------------------
# Fused GAT-layer kernel: projection + attention + masked softmax + aggregation
# + causal gating, one batch element per grid step.
# ----------------------------------------------------------------------------
def gat_kernel(x_ref, adjb_ref, w_ref, a_ref, gw_ref, gb_ref, o_ref,
               *, num_heads, out_dim, use_gating):
    H, D = num_heads, out_dim
    x = x_ref[0]                                      # (N, Fin)
    adj_bias = adjb_ref[0]                            # (N, N): 0 on edges, -inf elsewhere

    # All heads' projections in a single MXU matmul: (N, Fin) @ (Fin, H*D).
    xt_all = jnp.dot(x, w_ref[...], preferred_element_type=jnp.float32)

    # a1/a2 dot products for every head in a single MXU matmul (replaces 2*H
    # XLU lane reductions): s[:, h] = xt_h . a1_h, s[:, H+h] = xt_h . a2_h.
    s = jnp.dot(xt_all, a_ref[...], preferred_element_type=jnp.float32)   # (N, 2H)

    for h in range(H):                                # small static unroll (H=4)
        s1 = s[:, h:h + 1]                            # (N, 1)  = x_i . a1_h
        s2 = s[:, H + h:H + h + 1]                    # (N, 1)  = x_j . a2_h
        e = s1 + jnp.transpose(s2)                    # (N, N)  e[i,j] = s1[i] + s2[j]
        e = jnp.where(e > 0, e, 0.2 * e)              # leaky_relu(0.2)
        e = e + adj_bias                              # masked_fill(adj == 0, -inf)

        m = jnp.max(e, axis=-1, keepdims=True)
        p = jnp.exp(e - m)
        attn = p * pl.reciprocal(jnp.sum(p, axis=-1, keepdims=True), approx=True)
        # TODO(synk): attention dropout omitted (eval-mode / deterministic kernel).

        xt_h = xt_all[:, h * D:(h + 1) * D]           # (N, D)
        out_h = jnp.dot(attn, xt_h, preferred_element_type=jnp.float32)

        if use_gating:                                # causal gating: sigmoid(Linear(out))
            z = jnp.dot(out_h, gw_ref[...],
                        preferred_element_type=jnp.float32) + gb_ref[...]
            gate = pl.reciprocal(1.0 + jnp.exp(-z), approx=True)
            out_h = out_h * gate

        # Write this head's slab directly into the output (no concat).
        o_ref[0, :, h * D:(h + 1) * D] = out_h


# ----------------------------------------------------------------------------
# Wrapper: grid-invariant precompute + pallas_call
# ----------------------------------------------------------------------------
def causal_structure_gat_forward(x, causal_structure, params, adj=None, *,
                                 use_causal_weighting=True,
                                 use_causal_gating=True):
    B, N, Fin = x.shape
    W = params["W"]
    att = params["att"]
    H, _, D = W.shape

    if adj is None:
        adj = causal_structure                        # torch path: adj defaults to SCM structure
    if use_causal_weighting:
        adj = adj * params["causal_weight"]

    # --- grid-invariant precompute, hoisted out of the kernel (per review) ---
    adj_bias = jnp.where(adj == 0, -jnp.inf, 0.0).astype(jnp.float32)
    adj_bias = jnp.broadcast_to(adj_bias, (B, N, N))  # supports 2-D or per-batch adj

    w_all = jnp.transpose(W, (1, 0, 2)).reshape(Fin, H * D)            # (Fin, H*D)

    a = att[..., 0]                                   # (H, 2D) -> block-diag (H*D, 2H)
    eye = jnp.eye(H, dtype=W.dtype)
    a1_blk = (a[:, :D, None] * eye[:, None, :]).reshape(H * D, H)
    a2_blk = (a[:, D:, None] * eye[:, None, :]).reshape(H * D, H)
    a_stack = jnp.concatenate([a1_blk, a2_blk], axis=-1)               # (H*D, 2H)

    gate_w = params["gate_w"]                         # (D, D) input-major: y = x @ gate_w + b
    gate_b = params["gate_b"].reshape(1, D)

    # TODO(synk): concat=False (mean over heads) path not implemented; concat=True only.

    kernel = functools.partial(gat_kernel, num_heads=H, out_dim=D,
                               use_gating=use_causal_gating)
    return pl.pallas_call(
        kernel,
        out_shape=jax.ShapeDtypeStruct((B, N, H * D), jnp.float32),
        grid=(B,),
        in_specs=[
            pl.BlockSpec((1, N, Fin), lambda b: (b, 0, 0)),
            pl.BlockSpec((1, N, N), lambda b: (b, 0, 0)),
            pl.BlockSpec((Fin, H * D), lambda b: (0, 0)),
            pl.BlockSpec((H * D, 2 * H), lambda b: (0, 0)),
            pl.BlockSpec((D, D), lambda b: (0, 0)),
            pl.BlockSpec((1, D), lambda b: (0, 0)),
        ],
        out_specs=pl.BlockSpec((1, N, H * D), lambda b: (b, 0, 0)),
        compiler_params=pltpu.CompilerParams(dimension_semantics=("parallel",)),
    )(x, adj_bias, w_all, a_stack, gate_w, gate_b)


# ----------------------------------------------------------------------------
# Pure-JAX reference (mirrors the torch forward, eval mode)
# ----------------------------------------------------------------------------
def causal_structure_gat_ref(x, causal_structure, params, adj=None, *,
                             use_causal_weighting=True, use_causal_gating=True):
    B, N, _ = x.shape
    W = params["W"]
    att = params["att"]
    H, _, D = W.shape
    if adj is None:
        adj = causal_structure
    if use_causal_weighting:
        adj = adj * params["causal_weight"]
    adj = jnp.broadcast_to(adj, (B, N, N))

    xt = jnp.einsum("bnf,hfd->bhnd", x, W)            # (B,H,N,D)
    a = att[..., 0]
    s1 = jnp.einsum("bhnd,hd->bhn", xt, a[:, :D])
    s2 = jnp.einsum("bhnd,hd->bhn", xt, a[:, D:])
    e = s1[..., :, None] + s2[..., None, :]           # (B,H,N,N)
    e = jnp.where(e > 0, e, 0.2 * e)
    e = jnp.where(adj[:, None, :, :] == 0, -jnp.inf, e)
    attn = jax.nn.softmax(e, axis=-1)
    out = jnp.einsum("bhij,bhjd->bhid", attn, xt)     # (B,H,N,D)
    if use_causal_gating:
        gate = jax.nn.sigmoid(out @ params["gate_w"] + params["gate_b"])
        out = out * gate
    return jnp.transpose(out, (0, 2, 1, 3)).reshape(B, N, H * D)


# ----------------------------------------------------------------------------
# Deterministic parameter init (xavier-uniform style)
# ----------------------------------------------------------------------------
def xavier_uniform(key, shape):
    receptive = 1
    for s in shape[2:]:
        receptive *= s
    fan_in = shape[1] * receptive
    fan_out = shape[0] * receptive
    bound = (6.0 / (fan_in + fan_out)) ** 0.5
    return jax.random.uniform(key, shape, jnp.float32, -bound, bound)


def init_params(key, input_dim, output_dim, num_heads=4):
    kw, ka, kg, kb = jax.random.split(key, 4)
    return {
        "W": xavier_uniform(kw, (num_heads, input_dim, output_dim)),
        "att": xavier_uniform(ka, (num_heads, 2 * output_dim, 1)),
        "causal_weight": jnp.float32(1.0),
        # gate Linear(D, D) stored input-major: y = x @ gate_w + gate_b.
        "gate_w": xavier_uniform(kg, (output_dim, output_dim)),
        "gate_b": jax.random.uniform(kb, (output_dim,), jnp.float32, -0.1, 0.1),
    }


# ----------------------------------------------------------------------------
if __name__ == "__main__":
    B, N = 2, 8                       # batch, nodes
    input_dim, output_dim, num_heads = 16, 8, 4

    key = jax.random.PRNGKey(0)
    key, kx, kc, kp = jax.random.split(key, 4)

    x = jax.random.normal(kx, (B, N, input_dim), jnp.float32)
    # SCM causal-structure matrix (binary, with self-loops so no row is fully masked).
    cs = (jax.random.uniform(kc, (N, N)) > 0.5).astype(jnp.float32)
    cs = jnp.maximum(cs, jnp.eye(N, dtype=jnp.float32))

    params = init_params(kp, input_dim, output_dim, num_heads)

    out = causal_structure_gat_forward(x, cs, params)
    out = jax.block_until_ready(out)

    ref = causal_structure_gat_ref(x, cs, params)
    assert out.shape == (B, N, num_heads * output_dim), out.shape
    max_err = float(jnp.max(jnp.abs(out - ref)))
    assert jnp.allclose(out, ref, atol=2e-2, rtol=2e-2), max_err

    print("KERNEL_OK")
</pallas_src>

<mosaic_0001>
module attributes {stable_mosaic.version = 11 : i64} {
  func.func @gat_kernel(%arg0: i32, %arg1: memref<1x8x16xf32, #tpu.memory_space<vmem>>, %arg2: memref<1x8x8xf32, #tpu.memory_space<vmem>>, %arg3: memref<16x32xf32, #tpu.memory_space<vmem>>, %arg4: memref<32x8xf32, #tpu.memory_space<vmem>>, %arg5: memref<8x8xf32, #tpu.memory_space<vmem>>, %arg6: memref<1x8xf32, #tpu.memory_space<vmem>>, %arg7: memref<1x8x32xf32, #tpu.memory_space<vmem>>) attributes {dimension_semantics = [#tpu.dimension_semantics<parallel>], iteration_bounds = array<i64: 2>, scalar_prefetch = 0 : i64, scratch_operands = 0 : i64, tpu.core_type = #tpu.core_type<tc>, window_params = [{transform_indices = @transform_0, window_bounds = array<i64: 1, 8, 16>}, {transform_indices = @transform_1, window_bounds = array<i64: 1, 8, 8>}, {pipeline_mode = #tpu.pipeline_mode<synchronous>, transform_indices = @transform_2, window_bounds = array<i64: 16, 32>}, {pipeline_mode = #tpu.pipeline_mode<synchronous>, transform_indices = @transform_3, window_bounds = array<i64: 32, 8>}, {pipeline_mode = #tpu.pipeline_mode<synchronous>, transform_indices = @transform_4, window_bounds = array<i64: 8, 8>}, {pipeline_mode = #tpu.pipeline_mode<synchronous>, transform_indices = @transform_5, window_bounds = array<i64: 1, 8>}, {transform_indices = @transform_6, window_bounds = array<i64: 1, 8, 32>}]} {
    %c0 = arith.constant 0 : index
    %c0_0 = arith.constant 0 : index
    %c0_1 = arith.constant 0 : index
    %0 = vector.load %arg1[%c0, %c0_0, %c0_1] : memref<1x8x16xf32, #tpu.memory_space<vmem>>, vector<1x8x16xf32>
    %1 = vector.shape_cast %0 : vector<1x8x16xf32> to vector<8x16xf32>
    %c0_2 = arith.constant 0 : index
    %c0_3 = arith.constant 0 : index
    %c0_4 = arith.constant 0 : index
    %2 = vector.load %arg2[%c0_2, %c0_3, %c0_4] : memref<1x8x8xf32, #tpu.memory_space<vmem>>, vector<1x8x8xf32>
    %3 = vector.shape_cast %2 : vector<1x8x8xf32> to vector<8x8xf32>
    %c0_5 = arith.constant 0 : index
    %c0_6 = arith.constant 0 : index
    %4 = vector.load %arg3[%c0_5, %c0_6] : memref<16x32xf32, #tpu.memory_space<vmem>>, vector<16x32xf32>
    %cst = arith.constant dense<0.000000e+00> : vector<8x32xf32>
    %5 = tpu.matmul %1, %4, %cst {dimension_numbers = #tpu.dot_dimension_numbers<[1], [0], [0], [1], [0, 0, 1, 1], [], []>} : vector<8x16xf32>, vector<16x32xf32>, vector<8x32xf32> -> vector<8x32xf32>
    %c0_7 = arith.constant 0 : index
    %c0_8 = arith.constant 0 : index
    %6 = vector.load %arg4[%c0_7, %c0_8] : memref<32x8xf32, #tpu.memory_space<vmem>>, vector<32x8xf32>
    %cst_9 = arith.constant dense<0.000000e+00> : vector<8x8xf32>
    %7 = tpu.matmul %5, %6, %cst_9 {dimension_numbers = #tpu.dot_dimension_numbers<[1], [0], [0], [1], [0, 0, 1, 1], [], []>} : vector<8x32xf32>, vector<32x8xf32>, vector<8x8xf32> -> vector<8x8xf32>
    %8 = vector.extract_strided_slice %7 {offsets = [0, 0], sizes = [8, 1], strides = [1, 1]} : vector<8x8xf32> to vector<8x1xf32>
    %9 = vector.extract_strided_slice %7 {offsets = [0, 4], sizes = [8, 1], strides = [1, 1]} : vector<8x8xf32> to vector<8x1xf32>
    %10 = tpu.transpose %9, [1, 0] : vector<8x1xf32> -> vector<1x8xf32>
    %11 = vector.broadcast %8 : vector<8x1xf32> to vector<8x8xf32>
    %12 = vector.broadcast %10 : vector<1x8xf32> to vector<8x8xf32>
    %13 = arith.addf %11, %12 : vector<8x8xf32>
    %cst_10 = arith.constant 0.000000e+00 : f32
    %14 = vector.broadcast %cst_10 : f32 to vector<8x8xf32>
    %15 = arith.cmpf ogt, %13, %14 : vector<8x8xf32>
    %cst_11 = arith.constant 2.000000e-01 : f32
    %16 = vector.broadcast %cst_11 : f32 to vector<8x8xf32>
    %17 = arith.mulf %16, %13 : vector<8x8xf32>
    %18 = arith.select %15, %13, %17 : vector<8x8xi1>, vector<8x8xf32>
    %19 = arith.addf %18, %3 : vector<8x8xf32>
    %cst_12 = arith.constant dense<0xFF800000> : vector<8xf32>
    %20 = vector.multi_reduction <maximumf>, %19, %cst_12 [1] : vector<8x8xf32> to vector<8xf32>
    %21 = vector.shape_cast %20 : vector<8xf32> to vector<8x1xf32>
    %22 = vector.broadcast %21 : vector<8x1xf32> to vector<8x8xf32>
    %23 = arith.subf %19, %22 : vector<8x8xf32>
    %24 = math.exp %23 : vector<8x8xf32>
    %cst_13 = arith.constant dense<0.000000e+00> : vector<8xf32>
    %25 = vector.multi_reduction <add>, %24, %cst_13 [1] : vector<8x8xf32> to vector<8xf32>
    %26 = vector.shape_cast %25 : vector<8xf32> to vector<8x1xf32>
    %27 = tpu.reciprocal %26 {approx = true} : vector<8x1xf32> -> vector<8x1xf32>
    %28 = vector.broadcast %27 : vector<8x1xf32> to vector<8x8xf32>
    %29 = arith.mulf %24, %28 : vector<8x8xf32>
    %30 = vector.extract_strided_slice %5 {offsets = [0, 0], sizes = [8, 8], strides = [1, 1]} : vector<8x32xf32> to vector<8x8xf32>
    %cst_14 = arith.constant dense<0.000000e+00> : vector<8x8xf32>
    %31 = tpu.matmul %29, %30, %cst_14 {dimension_numbers = #tpu.dot_dimension_numbers<[1], [0], [0], [1], [0, 0, 1, 1], [], []>} : vector<8x8xf32>, vector<8x8xf32>, vector<8x8xf32> -> vector<8x8xf32>
    %c0_15 = arith.constant 0 : index
    %c0_16 = arith.constant 0 : index
    %32 = vector.load %arg5[%c0_15, %c0_16] : memref<8x8xf32, #tpu.memory_space<vmem>>, vector<8x8xf32>
    %cst_17 = arith.constant dense<0.000000e+00> : vector<8x8xf32>
    %33 = tpu.matmul %31, %32, %cst_17 {dimension_numbers = #tpu.dot_dimension_numbers<[1], [0], [0], [1], [0, 0, 1, 1], [], []>} : vector<8x8xf32>, vector<8x8xf32>, vector<8x8xf32> -> vector<8x8xf32>
    %c0_18 = arith.constant 0 : index
    %c0_19 = arith.constant 0 : index
    %34 = vector.load %arg6[%c0_18, %c0_19] : memref<1x8xf32, #tpu.memory_space<vmem>>, vector<1x8xf32>
    %35 = vector.broadcast %34 : vector<1x8xf32> to vector<8x8xf32>
    %36 = arith.addf %33, %35 : vector<8x8xf32>
    %cst_20 = arith.constant 0.000000e+00 : f32
    %37 = vector.broadcast %cst_20 : f32 to vector<8x8xf32>
    %38 = arith.subf %37, %36 : vector<8x8xf32>
    %39 = math.exp %38 : vector<8x8xf32>
    %cst_21 = arith.constant 1.000000e+00 : f32
    %40 = vector.broadcast %cst_21 : f32 to vector<8x8xf32>
    %41 = arith.addf %40, %39 : vector<8x8xf32>
    %42 = tpu.reciprocal %41 {approx = true} : vector<8x8xf32> -> vector<8x8xf32>
    %43 = arith.mulf %31, %42 : vector<8x8xf32>
    %c0_22 = arith.constant 0 : index
    %c0_23 = arith.constant 0 : index
    %c0_24 = arith.constant 0 : index
    %44 = vector.load %arg7[%c0_22, %c0_23, %c0_24] : memref<1x8x32xf32, #tpu.memory_space<vmem>>, vector<1x8x8xf32>
    %45 = vector.shape_cast %44 : vector<1x8x8xf32> to vector<8x8xf32>
    %46 = vector.shape_cast %43 : vector<8x8xf32> to vector<1x8x8xf32>
    tpu.vector_store %arg7[%c0_22, %c0_23, %c0_24], %46 {strides = array<i32>} : memref<1x8x32xf32, #tpu.memory_space<vmem>>, vector<1x8x8xf32>,
    %47 = vector.extract_strided_slice %7 {offsets = [0, 1], sizes = [8, 1], strides = [1, 1]} : vector<8x8xf32> to vector<8x1xf32>
    %48 = vector.extract_strided_slice %7 {offsets = [0, 5], sizes = [8, 1], strides = [1, 1]} : vector<8x8xf32> to vector<8x1xf32>
    %49 = tpu.transpose %48, [1, 0] : vector<8x1xf32> -> vector<1x8xf32>
    %50 = vector.broadcast %47 : vector<8x1xf32> to vector<8x8xf32>
    %51 = vector.broadcast %49 : vector<1x8xf32> to vector<8x8xf32>
    %52 = arith.addf %50, %51 : vector<8x8xf32>
    %cst_25 = arith.constant 0.000000e+00 : f32
    %53 = vector.broadcast %cst_25 : f32 to vector<8x8xf32>
    %54 = arith.cmpf ogt, %52, %53 : vector<8x8xf32>
    %cst_26 = arith.constant 2.000000e-01 : f32
    %55 = vector.broadcast %cst_26 : f32 to vector<8x8xf32>
    %56 = arith.mulf %55, %52 : vector<8x8xf32>
    %57 = arith.select %54, %52, %56 : vector<8x8xi1>, vector<8x8xf32>
    %58 = arith.addf %57, %3 : vector<8x8xf32>
    %cst_27 = arith.constant dense<0xFF800000> : vector<8xf32>
    %59 = vector.multi_reduction <maximumf>, %58, %cst_27 [1] : vector<8x8xf32> to vector<8xf32>
    %60 = vector.shape_cast %59 : vector<8xf32> to vector<8x1xf32>
    %61 = vector.broadcast %60 : vector<8x1xf32> to vector<8x8xf32>
    %62 = arith.subf %58, %61 : vector<8x8xf32>
    %63 = math.exp %62 : vector<8x8xf32>
    %cst_28 = arith.constant dense<0.000000e+00> : vector<8xf32>
    %64 = vector.multi_reduction <add>, %63, %cst_28 [1] : vector<8x8xf32> to vector<8xf32>
    %65 = vector.shape_cast %64 : vector<8xf32> to vector<8x1xf32>
    %66 = tpu.reciprocal %65 {approx = true} : vector<8x1xf32> -> vector<8x1xf32>
    %67 = vector.broadcast %66 : vector<8x1xf32> to vector<8x8xf32>
    %68 = arith.mulf %63, %67 : vector<8x8xf32>
    %69 = vector.extract_strided_slice %5 {offsets = [0, 8], sizes = [8, 8], strides = [1, 1]} : vector<8x32xf32> to vector<8x8xf32>
    %cst_29 = arith.constant dense<0.000000e+00> : vector<8x8xf32>
    %70 = tpu.matmul %68, %69, %cst_29 {dimension_numbers = #tpu.dot_dimension_numbers<[1], [0], [0], [1], [0, 0, 1, 1], [], []>} : vector<8x8xf32>, vector<8x8xf32>, vector<8x8xf32> -> vector<8x8xf32>
    %c0_30 = arith.constant 0 : index
    %c0_31 = arith.constant 0 : index
    %71 = vector.load %arg5[%c0_30, %c0_31] : memref<8x8xf32, #tpu.memory_space<vmem>>, vector<8x8xf32>
    %cst_32 = arith.constant dense<0.000000e+00> : vector<8x8xf32>
    %72 = tpu.matmul %70, %71, %cst_32 {dimension_numbers = #tpu.dot_dimension_numbers<[1], [0], [0], [1], [0, 0, 1, 1], [], []>} : vector<8x8xf32>, vector<8x8xf32>, vector<8x8xf32> -> vector<8x8xf32>
    %c0_33 = arith.constant 0 : index
    %c0_34 = arith.constant 0 : index
    %73 = vector.load %arg6[%c0_33, %c0_34] : memref<1x8xf32, #tpu.memory_space<vmem>>, vector<1x8xf32>
    %74 = vector.broadcast %73 : vector<1x8xf32> to vector<8x8xf32>
    %75 = arith.addf %72, %74 : vector<8x8xf32>
    %cst_35 = arith.constant 0.000000e+00 : f32
    %76 = vector.broadcast %cst_35 : f32 to vector<8x8xf32>
    %77 = arith.subf %76, %75 : vector<8x8xf32>
    %78 = math.exp %77 : vector<8x8xf32>
    %cst_36 = arith.constant 1.000000e+00 : f32
    %79 = vector.broadcast %cst_36 : f32 to vector<8x8xf32>
    %80 = arith.addf %79, %78 : vector<8x8xf32>
    %81 = tpu.reciprocal %80 {approx = true} : vector<8x8xf32> -> vector<8x8xf32>
    %82 = arith.mulf %70, %81 : vector<8x8xf32>
    %c0_37 = arith.constant 0 : index
    %c0_38 = arith.constant 0 : index
    %c8 = arith.constant 8 : index
    %83 = vector.load %arg7[%c0_37, %c0_38, %c8] : memref<1x8x32xf32, #tpu.memory_space<vmem>>, vector<1x8x8xf32>
    %84 = vector.shape_cast %83 : vector<1x8x8xf32> to vector<8x8xf32>
    %85 = vector.shape_cast %82 : vector<8x8xf32> to vector<1x8x8xf32>
    tpu.vector_store %arg7[%c0_37, %c0_38, %c8], %85 {strides = array<i32>} : memref<1x8x32xf32, #tpu.memory_space<vmem>>, vector<1x8x8xf32>,
    %86 = vector.extract_strided_slice %7 {offsets = [0, 2], sizes = [8, 1], strides = [1, 1]} : vector<8x8xf32> to vector<8x1xf32>
    %87 = vector.extract_strided_slice %7 {offsets = [0, 6], sizes = [8, 1], strides = [1, 1]} : vector<8x8xf32> to vector<8x1xf32>
    %88 = tpu.transpose %87, [1, 0] : vector<8x1xf32> -> vector<1x8xf32>
    %89 = vector.broadcast %86 : vector<8x1xf32> to vector<8x8xf32>
    %90 = vector.broadcast %88 : vector<1x8xf32> to vector<8x8xf32>
    %91 = arith.addf %89, %90 : vector<8x8xf32>
    %cst_39 = arith.constant 0.000000e+00 : f32
    %92 = vector.broadcast %cst_39 : f32 to vector<8x8xf32>
    %93 = arith.cmpf ogt, %91, %92 : vector<8x8xf32>
    %cst_40 = arith.constant 2.000000e-01 : f32
    %94 = vector.broadcast %cst_40 : f32 to vector<8x8xf32>
    %95 = arith.mulf %94, %91 : vector<8x8xf32>
    %96 = arith.select %93, %91, %95 : vector<8x8xi1>, vector<8x8xf32>
    %97 = arith.addf %96, %3 : vector<8x8xf32>
    %cst_41 = arith.constant dense<0xFF800000> : vector<8xf32>
    %98 = vector.multi_reduction <maximumf>, %97, %cst_41 [1] : vector<8x8xf32> to vector<8xf32>
    %99 = vector.shape_cast %98 : vector<8xf32> to vector<8x1xf32>
    %100 = vector.broadcast %99 : vector<8x1xf32> to vector<8x8xf32>
    %101 = arith.subf %97, %100 : vector<8x8xf32>
    %102 = math.exp %101 : vector<8x8xf32>
    %cst_42 = arith.constant dense<0.000000e+00> : vector<8xf32>
    %103 = vector.multi_reduction <add>, %102, %cst_42 [1] : vector<8x8xf32> to vector<8xf32>
    %104 = vector.shape_cast %103 : vector<8xf32> to vector<8x1xf32>
    %105 = tpu.reciprocal %104 {approx = true} : vector<8x1xf32> -> vector<8x1xf32>
    %106 = vector.broadcast %105 : vector<8x1xf32> to vector<8x8xf32>
    %107 = arith.mulf %102, %106 : vector<8x8xf32>
    %108 = vector.extract_strided_slice %5 {offsets = [0, 16], sizes = [8, 8], strides = [1, 1]} : vector<8x32xf32> to vector<8x8xf32>
    %cst_43 = arith.constant dense<0.000000e+00> : vector<8x8xf32>
    %109 = tpu.matmul %107, %108, %cst_43 {dimension_numbers = #tpu.dot_dimension_numbers<[1], [0], [0], [1], [0, 0, 1, 1], [], []>} : vector<8x8xf32>, vector<8x8xf32>, vector<8x8xf32> -> vector<8x8xf32>
    %c0_44 = arith.constant 0 : index
    %c0_45 = arith.constant 0 : index
    %110 = vector.load %arg5[%c0_44, %c0_45] : memref<8x8xf32, #tpu.memory_space<vmem>>, vector<8x8xf32>
    %cst_46 = arith.constant dense<0.000000e+00> : vector<8x8xf32>
    %111 = tpu.matmul %109, %110, %cst_46 {dimension_numbers = #tpu.dot_dimension_numbers<[1], [0], [0], [1], [0, 0, 1, 1], [], []>} : vector<8x8xf32>, vector<8x8xf32>, vector<8x8xf32> -> vector<8x8xf32>
    %c0_47 = arith.constant 0 : index
    %c0_48 = arith.constant 0 : index
    %112 = vector.load %arg6[%c0_47, %c0_48] : memref<1x8xf32, #tpu.memory_space<vmem>>, vector<1x8xf32>
    %113 = vector.broadcast %112 : vector<1x8xf32> to vector<8x8xf32>
    %114 = arith.addf %111, %113 : vector<8x8xf32>
    %cst_49 = arith.constant 0.000000e+00 : f32
    %115 = vector.broadcast %cst_49 : f32 to vector<8x8xf32>
    %116 = arith.subf %115, %114 : vector<8x8xf32>
    %117 = math.exp %116 : vector<8x8xf32>
    %cst_50 = arith.constant 1.000000e+00 : f32
    %118 = vector.broadcast %cst_50 : f32 to vector<8x8xf32>
    %119 = arith.addf %118, %117 : vector<8x8xf32>
    %120 = tpu.reciprocal %119 {approx = true} : vector<8x8xf32> -> vector<8x8xf32>
    %121 = arith.mulf %109, %120 : vector<8x8xf32>
    %c0_51 = arith.constant 0 : index
    %c0_52 = arith.constant 0 : index
    %c16 = arith.constant 16 : index
    %122 = vector.load %arg7[%c0_51, %c0_52, %c16] : memref<1x8x32xf32, #tpu.memory_space<vmem>>, vector<1x8x8xf32>
    %123 = vector.shape_cast %122 : vector<1x8x8xf32> to vector<8x8xf32>
    %124 = vector.shape_cast %121 : vector<8x8xf32> to vector<1x8x8xf32>
    tpu.vector_store %arg7[%c0_51, %c0_52, %c16], %124 {strides = array<i32>} : memref<1x8x32xf32, #tpu.memory_space<vmem>>, vector<1x8x8xf32>,
    %125 = vector.extract_strided_slice %7 {offsets = [0, 3], sizes = [8, 1], strides = [1, 1]} : vector<8x8xf32> to vector<8x1xf32>
    %126 = vector.extract_strided_slice %7 {offsets = [0, 7], sizes = [8, 1], strides = [1, 1]} : vector<8x8xf32> to vector<8x1xf32>
    %127 = tpu.transpose %126, [1, 0] : vector<8x1xf32> -> vector<1x8xf32>
    %128 = vector.broadcast %125 : vector<8x1xf32> to vector<8x8xf32>
    %129 = vector.broadcast %127 : vector<1x8xf32> to vector<8x8xf32>
    %130 = arith.addf %128, %129 : vector<8x8xf32>
    %cst_53 = arith.constant 0.000000e+00 : f32
    %131 = vector.broadcast %cst_53 : f32 to vector<8x8xf32>
    %132 = arith.cmpf ogt, %130, %131 : vector<8x8xf32>
    %cst_54 = arith.constant 2.000000e-01 : f32
    %133 = vector.broadcast %cst_54 : f32 to vector<8x8xf32>
    %134 = arith.mulf %133, %130 : vector<8x8xf32>
    %135 = arith.select %132, %130, %134 : vector<8x8xi1>, vector<8x8xf32>
    %136 = arith.addf %135, %3 : vector<8x8xf32>
    %cst_55 = arith.constant dense<0xFF800000> : vector<8xf32>
    %137 = vector.multi_reduction <maximumf>, %136, %cst_55 [1] : vector<8x8xf32> to vector<8xf32>
    %138 = vector.shape_cast %137 : vector<8xf32> to vector<8x1xf32>
    %139 = vector.broadcast %138 : vector<8x1xf32> to vector<8x8xf32>
    %140 = arith.subf %136, %139 : vector<8x8xf32>
    %141 = math.exp %140 : vector<8x8xf32>
    %cst_56 = arith.constant dense<0.000000e+00> : vector<8xf32>
    %142 = vector.multi_reduction <add>, %141, %cst_56 [1] : vector<8x8xf32> to vector<8xf32>
    %143 = vector.shape_cast %142 : vector<8xf32> to vector<8x1xf32>
    %144 = tpu.reciprocal %143 {approx = true} : vector<8x1xf32> -> vector<8x1xf32>
    %145 = vector.broadcast %144 : vector<8x1xf32> to vector<8x8xf32>
    %146 = arith.mulf %141, %145 : vector<8x8xf32>
    %147 = vector.extract_strided_slice %5 {offsets = [0, 24], sizes = [8, 8], strides = [1, 1]} : vector<8x32xf32> to vector<8x8xf32>
    %cst_57 = arith.constant dense<0.000000e+00> : vector<8x8xf32>
    %148 = tpu.matmul %146, %147, %cst_57 {dimension_numbers = #tpu.dot_dimension_numbers<[1], [0], [0], [1], [0, 0, 1, 1], [], []>} : vector<8x8xf32>, vector<8x8xf32>, vector<8x8xf32> -> vector<8x8xf32>
    %c0_58 = arith.constant 0 : index
    %c0_59 = arith.constant 0 : index
    %149 = vector.load %arg5[%c0_58, %c0_59] : memref<8x8xf32, #tpu.memory_space<vmem>>, vector<8x8xf32>
    %cst_60 = arith.constant dense<0.000000e+00> : vector<8x8xf32>
    %150 = tpu.matmul %148, %149, %cst_60 {dimension_numbers = #tpu.dot_dimension_numbers<[1], [0], [0], [1], [0, 0, 1, 1], [], []>} : vector<8x8xf32>, vector<8x8xf32>, vector<8x8xf32> -> vector<8x8xf32>
    %c0_61 = arith.constant 0 : index
    %c0_62 = arith.constant 0 : index
    %151 = vector.load %arg6[%c0_61, %c0_62] : memref<1x8xf32, #tpu.memory_space<vmem>>, vector<1x8xf32>
    %152 = vector.broadcast %151 : vector<1x8xf32> to vector<8x8xf32>
    %153 = arith.addf %150, %152 : vector<8x8xf32>
    %cst_63 = arith.constant 0.000000e+00 : f32
    %154 = vector.broadcast %cst_63 : f32 to vector<8x8xf32>
    %155 = arith.subf %154, %153 : vector<8x8xf32>
    %156 = math.exp %155 : vector<8x8xf32>
    %cst_64 = arith.constant 1.000000e+00 : f32
    %157 = vector.broadcast %cst_64 : f32 to vector<8x8xf32>
    %158 = arith.addf %157, %156 : vector<8x8xf32>
    %159 = tpu.reciprocal %158 {approx = true} : vector<8x8xf32> -> vector<8x8xf32>
    %160 = arith.mulf %148, %159 : vector<8x8xf32>
    %c0_65 = arith.constant 0 : index
    %c0_66 = arith.constant 0 : index
    %c24 = arith.constant 24 : index
    %161 = vector.load %arg7[%c0_65, %c0_66, %c24] : memref<1x8x32xf32, #tpu.memory_space<vmem>>, vector<1x8x8xf32>
    %162 = vector.shape_cast %161 : vector<1x8x8xf32> to vector<8x8xf32>
    %163 = vector.shape_cast %160 : vector<8x8xf32> to vector<1x8x8xf32>
    tpu.vector_store %arg7[%c0_65, %c0_66, %c24], %163 {strides = array<i32>} : memref<1x8x32xf32, #tpu.memory_space<vmem>>, vector<1x8x8xf32>,
    return
  }
  func.func @transform_0(%arg0: i32) -> (i32, i32, i32) {
    %c0_i32 = arith.constant 0 : i32
    %c0_i32_0 = arith.constant 0 : i32
    %c0_i32_1 = arith.constant 0 : i32
    return %arg0, %c0_i32, %c0_i32_0 : i32, i32, i32
  }
  func.func @transform_1(%arg0: i32) -> (i32, i32, i32) {
    %c0_i32 = arith.constant 0 : i32
    %c0_i32_0 = arith.constant 0 : i32
    %c0_i32_1 = arith.constant 0 : i32
    return %arg0, %c0_i32, %c0_i32_0 : i32, i32, i32
  }
  func.func @transform_2(%arg0: i32) -> (i32, i32) {
    %c0_i32 = arith.constant 0 : i32
    %c0_i32_0 = arith.constant 0 : i32
    %c0_i32_1 = arith.constant 0 : i32
    return %c0_i32, %c0_i32_0 : i32, i32
  }
  func.func @transform_3(%arg0: i32) -> (i32, i32) {
    %c0_i32 = arith.constant 0 : i32
    %c0_i32_0 = arith.constant 0 : i32
    %c0_i32_1 = arith.constant 0 : i32
    return %c0_i32, %c0_i32_0 : i32, i32
  }
  func.func @transform_4(%arg0: i32) -> (i32, i32) {
    %c0_i32 = arith.constant 0 : i32
    %c0_i32_0 = arith.constant 0 : i32
    %c0_i32_1 = arith.constant 0 : i32
    return %c0_i32, %c0_i32_0 : i32, i32
  }
  func.func @transform_5(%arg0: i32) -> (i32, i32) {
    %c0_i32 = arith.constant 0 : i32
    %c0_i32_0 = arith.constant 0 : i32
    %c0_i32_1 = arith.constant 0 : i32
    return %c0_i32, %c0_i32_0 : i32, i32
  }
  func.func @transform_6(%arg0: i32) -> (i32, i32, i32) {
    %c0_i32 = arith.constant 0 : i32
    %c0_i32_0 = arith.constant 0 : i32
    %c0_i32_1 = arith.constant 0 : i32
    return %arg0, %c0_i32, %c0_i32_0 : i32, i32, i32
  }
}

</mosaic_0001>

<llo_original>
// kernel: tpu_custom_call.1
$region0: #{tpu_custom_call.1}
  #allocation0 [shape = 'u32[]', space=smem, size = 0x4, offset = 0x4, fixed_abs, tag = 'smem constant byte address 0x4 - core index']
  #allocation1 [shape = 'u32[144,128]{1,0:T(1,128)}', space=vmem, size = 0x12000, scoped, tag = 'internal scratch']
  %s0 = inlined_call_operand.vmem [shape: f32[2,8,16], index: 0, kind: input, shape index: {}]
  %s1 = inlined_call_operand.vmem [shape: f32[2,8,8], index: 1, kind: input, shape index: {}]
  %s2 = inlined_call_operand.hbm [shape: f32[16,32], index: 2, kind: input, shape index: {}]
  %s3 = inlined_call_operand.vmem [shape: f32[32,8], index: 3, kind: input, shape index: {}]
  %s4 = inlined_call_operand.vmem [shape: f32[8,8], index: 4, kind: input, shape index: {}]
  %s5 = inlined_call_operand.vmem [shape: f32[1,8], index: 5, kind: input, shape index: {}]
  %s6 = inlined_call_operand.hbm [shape: f32[2,8,32], index: 6, kind: output, shape index: {}]
  %s7 = sld [smem:[#allocation0]]
  $region61: #{tpu_custom_call.1} parent=0
    _
  %s9 = ssub.s32 1, %s7
  %s10 = scalar_select 0, %s9, %s7
  $region1: #{tpu_custom_call.1} parent=0
    #allocation2 [shape = 'u8[8192]{0}', space=vmem, size = 0x2000, scoped, tag = 'input window, operand 2, single buffered']
    #allocation3 [shape = 's32[2]{0}', space=sflag, size = 0x8, scoped, tag = 'scoped memory for tpu_custom_call.1']
    #allocation4 [shape = 's32[2]{0}', space=sflag, size = 0x8, scoped, tag = 'scoped memory for tpu_custom_call.1']
    #allocation5 [shape = 'u8[8192]{0}', space=vmem, size = 0x2000, scoped, tag = 'output window, operand 0']
    %11 = vsyncpa [#allocation3], 0
    %12 = vsyncpa [#allocation4], 0
    %s13 = scalar_lea.sflag [#allocation4], 1
    %14 = vsyncpa %s13, 0
    loop: start=0, step=1, limit=4
    $region2: #{tpu_custom_call.1} parent=1 // loop_pre_header
      _
    $region3: #{tpu_custom_call.1} parent=1 // loop_header
      %s16 = sphi 0, %s20
      %p17 = scmp.ge.s32.totalorder %s16, 4
      %s26 = sphi 0, %s28
      %s29 = sphi 0, %s26
      %s30 = sphi 0, %s29
      %s46 = sphi 0, %s30
      %s52 = sphi 0, %s54
      %s55 = sphi 0, %s52
      %s56 = sphi 0, %s55
      %s72 = sphi 0, %s56
      %s76 = sphi 0, %s76
      %s78 = sphi 0, %s76
      %s79 = sphi 0, %s78
      %s93 = sphi 0, %s79
      %s97 = sphi 0, %s97
      %s99 = sphi 0, %s97
      %s100 = sphi 0, %s99
      %s114 = sphi 0, %s100
      %s118 = sphi 0, %s118
      %s120 = sphi 0, %s118
      %s121 = sphi 0, %s120
      %s135 = sphi 0, %s121
      %s139 = sphi 0, %s139
      %s141 = sphi 0, %s139
      %s142 = sphi 0, %s141
      %s156 = sphi 0, %s142
      %s162 = sphi 0, %s164
      %s165 = sphi 0, %s162
      %s166 = sphi 0, %s165
      %s182 = sphi 0, %s166
    $region4: #{tpu_custom_call.1} parent=1 // loop_header_branch
      %19 = sbr.rel (%p17) target = $region8
    $region5: #{tpu_custom_call.1} parent=1 // loop_body
      %s21 = ssub.s32 %s16, 1
      %s22 = ssub.s32 %s16, 2
      %s23 = sadd.s32 %s16, 1
      %s24 = ssub.s32 %s16, %s23
      %p25 = scmp.eq.s32.totalorder %s24, 0
      %s27 = sadd.s32 %s26, 1
      %s28 = scalar_select %p25, %s26, %s27
      %p31 = pneg %p25
      %p32 = scmp.eq.s32.totalorder %s16, 1
      %p33 = por %p31, %p32
      %p34 = scmp.ne.s32.totalorder %s26, %s29
      %p35 = scmp.eq.s32.totalorder %s16, 0
      %p36 = por %p34, %p35
      %p37 = scmp.ne.s32.totalorder %s26, %s29
      %p38 = scmp.eq.s32.totalorder %s21, 1
      %p39 = por %p37, %p38
      %p40 = scmp.ne.s32.totalorder %s29, %s30
      %p41 = scmp.eq.s32.totalorder %s21, 0
      %p42 = por %p40, %p41
      %p43 = scmp.ne.s32.totalorder %s29, %s30
      %p44 = scmp.eq.s32.totalorder %s22, 1
      %p45 = por %p43, %p44
      %p47 = scmp.ne.s32.totalorder %s30, %s46
      %p48 = scmp.eq.s32.totalorder %s22, 0
      %p49 = por %p47, %p48
      %s50 = ssub.s32 %s16, %s23
      %p51 = scmp.eq.s32.totalorder %s50, 0
      %s53 = sadd.s32 %s52, 1
      %s54 = scalar_select %p51, %s52, %s53
      %p57 = pneg %p51
      %p58 = scmp.eq.s32.totalorder %s16, 1
      %p59 = por %p57, %p58
      %p60 = scmp.ne.s32.totalorder %s52, %s55
      %p61 = scmp.eq.s32.totalorder %s16, 0
      %p62 = por %p60, %p61
      %p63 = scmp.ne.s32.totalorder %s52, %s55
      %p64 = scmp.eq.s32.totalorder %s21, 1
      %p65 = por %p63, %p64
      %p66 = scmp.ne.s32.totalorder %s55, %s56
      %p67 = scmp.eq.s32.totalorder %s21, 0
      %p68 = por %p66, %p67
      %p69 = scmp.ne.s32.totalorder %s55, %s56
      %p70 = scmp.eq.s32.totalorder %s22, 1
      %p71 = por %p69, %p70
      %p73 = scmp.ne.s32.totalorder %s56, %s72
      %p74 = scmp.eq.s32.totalorder %s22, 0
      %p75 = por %p73, %p74
      %s77 = sadd.s32 %s76, 1
      %p80 = scmp.eq.s32.totalorder %s16, 1
      %p81 = scmp.ne.s32.totalorder %s76, %s78
      %p82 = scmp.eq.s32.totalorder %s16, 0
      %p83 = por %p81, %p82
      %p84 = scmp.ne.s32.totalorder %s76, %s78
      %p85 = scmp.eq.s32.totalorder %s21, 1
      %p86 = por %p84, %p85
      %p87 = scmp.ne.s32.totalorder %s78, %s79
      %p88 = scmp.eq.s32.totalorder %s21, 0
      %p89 = por %p87, %p88
      %p90 = scmp.ne.s32.totalorder %s78, %s79
      %p91 = scmp.eq.s32.totalorder %s22, 1
      %p92 = por %p90, %p91
      %p94 = scmp.ne.s32.totalorder %s79, %s93
      %p95 = scmp.eq.s32.totalorder %s22, 0
      %p96 = por %p94, %p95
      %s98 = sadd.s32 %s97, 1
      %p101 = scmp.eq.s32.totalorder %s16, 1
      %p102 = scmp.ne.s32.totalorder %s97, %s99
      %p103 = scmp.eq.s32.totalorder %s16, 0
      %p104 = por %p102, %p103
      %p105 = scmp.ne.s32.totalorder %s97, %s99
      %p106 = scmp.eq.s32.totalorder %s21, 1
      %p107 = por %p105, %p106
      %p108 = scmp.ne.s32.totalorder %s99, %s100
      %p109 = scmp.eq.s32.totalorder %s21, 0
      %p110 = por %p108, %p109
      %p111 = scmp.ne.s32.totalorder %s99, %s100
      %p112 = scmp.eq.s32.totalorder %s22, 1
      %p113 = por %p111, %p112
      %p115 = scmp.ne.s32.totalorder %s100, %s114
      %p116 = scmp.eq.s32.totalorder %s22, 0
      %p117 = por %p115, %p116
      %s119 = sadd.s32 %s118, 1
      %p122 = scmp.eq.s32.totalorder %s16, 1
      %p123 = scmp.ne.s32.totalorder %s118, %s120
      %p124 = scmp.eq.s32.totalorder %s16, 0
      %p125 = por %p123, %p124
      %p126 = scmp.ne.s32.totalorder %s118, %s120
      %p127 = scmp.eq.s32.totalorder %s21, 1
      %p128 = por %p126, %p127
      %p129 = scmp.ne.s32.totalorder %s120, %s121
      %p130 = scmp.eq.s32.totalorder %s21, 0
      %p131 = por %p129, %p130
      %p132 = scmp.ne.s32.totalorder %s120, %s121
      %p133 = scmp.eq.s32.totalorder %s22, 1
      %p134 = por %p132, %p133
      %p136 = scmp.ne.s32.totalorder %s121, %s135
      %p137 = scmp.eq.s32.totalorder %s22, 0
      %p138 = por %p136, %p137
      %s140 = sadd.s32 %s139, 1
      %p143 = scmp.eq.s32.totalorder %s16, 1
      %p144 = scmp.ne.s32.totalorder %s139, %s141
      %p145 = scmp.eq.s32.totalorder %s16, 0
      %p146 = por %p144, %p145
      %p147 = scmp.ne.s32.totalorder %s139, %s141
      %p148 = scmp.eq.s32.totalorder %s21, 1
      %p149 = por %p147, %p148
      %p150 = scmp.ne.s32.totalorder %s141, %s142
      %p151 = scmp.eq.s32.totalorder %s21, 0
      %p152 = por %p150, %p151
      %p153 = scmp.ne.s32.totalorder %s141, %s142
      %p154 = scmp.eq.s32.totalorder %s22, 1
      %p155 = por %p153, %p154
      %p157 = scmp.ne.s32.totalorder %s142, %s156
      %p158 = scmp.eq.s32.totalorder %s22, 0
      %p159 = por %p157, %p158
      %s160 = ssub.s32 %s16, %s23
      %p161 = scmp.eq.s32.totalorder %s160, 0
      %s163 = sadd.s32 %s162, 1
      %s164 = scalar_select %p161, %s162, %s163
      %p167 = pneg %p161
      %p168 = scmp.eq.s32.totalorder %s16, 1
      %p169 = por %p167, %p168
      %p170 = scmp.ne.s32.totalorder %s162, %s165
      %p171 = scmp.eq.s32.totalorder %s16, 0
      %p172 = por %p170, %p171
      %p173 = scmp.ne.s32.totalorder %s162, %s165
      %p174 = scmp.eq.s32.totalorder %s21, 1
      %p175 = por %p173, %p174
      %p176 = scmp.ne.s32.totalorder %s165, %s166
      %p177 = scmp.eq.s32.totalorder %s21, 0
      %p178 = por %p176, %p177
      %p179 = scmp.ne.s32.totalorder %s165, %s166
      %p180 = scmp.eq.s32.totalorder %s22, 1
      %p181 = por %p179, %p180
      %p183 = scmp.ne.s32.totalorder %s166, %s182
      %p184 = scmp.eq.s32.totalorder %s22, 0
      %p185 = por %p183, %p184
      %p186 = scmp.le.s32.totalorder 1, %s16
      %p187 = scmp.lt.s32.totalorder %s16, 3
      %p188 = pnand %p186, %p187
      %p189 = pneg %p188
      // Predicated region
      $region9: #{tpu_custom_call.1} parent=5 // pred_check
        _
      $region10: #{tpu_custom_call.1} parent=5 // pred_check_branch
        %191 = sbr.rel (%p188) target = $region12
      $region11: #{tpu_custom_call.1} parent=5 // pred_region
        %s192 = ssub.s32 %s16, 1
        // Predicated region
        $region13: #{tpu_custom_call.1} parent=11 // pred_check
          %p193 = pneg %p89
        $region14: #{tpu_custom_call.1} parent=11 // pred_check_branch
          %195 = sbr.rel (%p193) target = $region16
        $region15: #{tpu_custom_call.1} parent=11 // pred_region
          %s197 = ssub.s32 256, 256
          %198 = vsyncadd [#allocation3], %s197
          %s199 = sshll.u32 [#allocation2], 4
          %s200 = int_to_ptr.vmem [resolvable:$true] %s199
          %205 = dma.hbm_to_vmem [thread:$0]  %s2, 256, %s200, [#allocation3], 128, 128, 8
        $region16: #{tpu_custom_call.1} parent=11 // pred_fallthru
          _
        // Predicated region
        $region17: #{tpu_custom_call.1} parent=11 // pred_check
          %p206 = pneg %p110
        $region18: #{tpu_custom_call.1} parent=11 // pred_check_branch
          %208 = sbr.rel (%p206) target = $region20
        $region19: #{tpu_custom_call.1} parent=11 // pred_region
          _
        $region20: #{tpu_custom_call.1} parent=11 // pred_fallthru
          _
        // Predicated region
        $region21: #{tpu_custom_call.1} parent=11 // pred_check
          %p209 = pneg %p131
        $region22: #{tpu_custom_call.1} parent=11 // pred_check_branch
          %211 = sbr.rel (%p209) target = $region24
        $region23: #{tpu_custom_call.1} parent=11 // pred_region
          _
        $region24: #{tpu_custom_call.1} parent=11 // pred_fallthru
          _
        // Predicated region
        $region25: #{tpu_custom_call.1} parent=11 // pred_check
          %p212 = pneg %p152
        $region26: #{tpu_custom_call.1} parent=11 // pred_check_branch
          %214 = sbr.rel (%p212) target = $region28
        $region27: #{tpu_custom_call.1} parent=11 // pred_region
          _
        $region28: #{tpu_custom_call.1} parent=11 // pred_fallthru
          _
      $region12: #{tpu_custom_call.1} parent=5 // pred_fallthru
        _
      %p215 = scmp.lt.s32.totalorder %s16, 2
      // Predicated region
      $region29: #{tpu_custom_call.1} parent=5 // pred_check
        %p216 = pneg %p215
      $region30: #{tpu_custom_call.1} parent=5 // pred_check_branch
        %218 = sbr.rel (%p216) target = $region32
      $region31: #{tpu_custom_call.1} parent=5 // pred_region
        // Predicated region
        $region33: #{tpu_custom_call.1} parent=31 // pred_check
          %p219 = pneg %p36
        $region34: #{tpu_custom_call.1} parent=31 // pred_check_branch
          %221 = sbr.rel (%p219) target = $region36
        $region35: #{tpu_custom_call.1} parent=31 // pred_region
          %p222 = scmp.lt.s32.totalorder %s16, 1
          %s223 = scalar_select %p222, %s16, 1
          %s224 = smul.addr %s223, 8
          %s225 = scalar_lea.vmem %s0, %s224
        $region36: #{tpu_custom_call.1} parent=31 // pred_fallthru
          _
        // Predicated region
        $region37: #{tpu_custom_call.1} parent=31 // pred_check
          %p226 = pneg %p62
        $region38: #{tpu_custom_call.1} parent=31 // pred_check_branch
          %228 = sbr.rel (%p226) target = $region40
        $region39: #{tpu_custom_call.1} parent=31 // pred_region
          %p229 = scmp.lt.s32.totalorder %s16, 1
          %s230 = scalar_select %p229, %s16, 1
          %s231 = smul.addr %s230, 8
          %s232 = scalar_lea.vmem %s1, %s231
        $region40: #{tpu_custom_call.1} parent=31 // pred_fallthru
          _
      $region32: #{tpu_custom_call.1} parent=5 // pred_fallthru
        _
      %p233 = scmp.le.s32.totalorder 1, %s16
      %p234 = scmp.lt.s32.totalorder %s16, 3
      %p235 = pnand %p233, %p234
      %p236 = pneg %p235
      // Predicated region
      $region41: #{tpu_custom_call.1} parent=5 // pred_check
        _
      $region42: #{tpu_custom_call.1} parent=5 // pred_check_branch
        %238 = sbr.rel (%p235) target = $region44
      $region43: #{tpu_custom_call.1} parent=5 // pred_region
        %s239 = ssub.s32 %s16, 1
        // Predicated region
        $region45: #{tpu_custom_call.1} parent=43 // pred_check
          %p240 = pneg %p89
        $region46: #{tpu_custom_call.1} parent=43 // pred_check_branch
          %242 = sbr.rel (%p240) target = $region48
        $region47: #{tpu_custom_call.1} parent=43 // pred_region
          %243 = dma.done [#allocation3], 256
        $region48: #{tpu_custom_call.1} parent=43 // pred_fallthru
          _
        %p244 = scmp.lt.s32.totalorder %s21, 1
        %s245 = scalar_select %p244, %s21, 1
        %s246 = smul.addr %s245, 8
        %s247 = scalar_lea.vmem %s0, %s246
        %p248 = pneg %p42
        %p249 = pneg %p39
        %p250 = scmp.lt.s32.totalorder %s21, 1
        %s251 = scalar_select %p250, %s21, 1
        %s252 = smul.addr %s251, 8
        %s253 = scalar_lea.vmem %s1, %s252
        %p254 = pneg %p68
        %p255 = pneg %p65
        %p256 = pneg %p89
        %p257 = pneg %p86
        %p258 = pneg %p110
        %p259 = pneg %p107
        %p260 = pneg %p131
        %p261 = pneg %p128
        %p262 = pneg %p152
        %p263 = pneg %p149
        %p264 = pneg %p178
        %p265 = pneg %p175
        %s266 = sand.u32 %s165, 1
        %s267 = scalar_lea.sflag [#allocation4], %s266
        %s268 = sand.u32 %s165, 1
        %s269 = smul.addr %s268, 8
        %s270 = scalar_lea.vmem [#allocation5], %s269
        %p271 = scmp.lt.s32.totalorder %s21, 1
        %s272 = scalar_select %p271, %s21, 1
        %s273 = smul.addr %s272, 8
        %s274 = scalar_lea.vmem %s0, %s273
        %p275 = scmp.lt.s32.totalorder %s21, 1
        %s276 = scalar_select %p275, %s21, 1
        %s277 = smul.addr %s276, 8
        %s278 = scalar_lea.vmem %s1, %s277
        %v279 = vld [vmem:[%s274] sm:$0xff]
        %v280 = vld [vmem:[%s278] sm:$0xff]
        %v281 = vld [vmem:[#allocation2] sm:$0xff]
        %v282 = vld [vmem:[#allocation2 + $0x8] sm:$0xff]
        %vm283 = vcmask 130048
        %v285 = vsel %vm283, %v279, 0
        %287 = vmatprep.subr.mxu0 0.0
        %288 = vmatpush1.msra.mxu0 %v281
        %289 = vmatprep.subr.mxu0 0.0
        %290 = vmatpush1.msra.mxu0 %v282
        %291 = vmatprep.subr.mxu0 0.0
        %292 = vmatpush1.msra.mxu0 0.0
        %293 = vmatprep.subr.mxu0 0.0
        %294 = vmatpush1.msra.mxu0 0.0
        %295 = vmatprep.subr.mxu0 0.0
        %296 = vmatpush1.msra.mxu0 0.0
        %297 = vmatprep.subr.mxu0 0.0
        %298 = vmatpush1.msra.mxu0 0.0
        %299 = vmatprep.subr.mxu0 0.0
        %300 = vmatpush1.msra.mxu0 0.0
        %301 = vmatprep.subr.mxu0 0.0
        %302 = vmatpush1.msra.mxu0 0.0
        %303 = vmatprep.subr.mxu0 0.0
        %304 = vmatpush1.msra.mxu0 0.0
        %305 = vmatprep.subr.mxu0 0.0
        %306 = vmatpush1.msra.mxu0 0.0
        %307 = vmatprep.subr.mxu0 0.0
        %308 = vmatpush1.msra.mxu0 0.0
        %309 = vmatprep.subr.mxu0 0.0
        %310 = vmatpush1.msra.mxu0 0.0
        %311 = vmatprep.subr.mxu0 0.0
        %312 = vmatpush1.msra.mxu0 0.0
        %313 = vmatprep.subr.mxu0 0.0
        %314 = vmatpush1.msra.mxu0 0.0
        %315 = vmatprep.subr.mxu0 0.0
        %316 = vmatpush1.msra.mxu0 0.0
        %317 = vmatprep.subr.mxu0 0.0
        %318 = vmatpush1.msra.mxu0 0.0
        %319 = vmatprep.subr.mxu0 0.0
        %320 = vmatpush1.msra.mxu0 0.0
        %321 = vmatprep.subr.mxu0 0.0
        %322 = vmatpush1.msra.mxu0 0.0
        %323 = vmatprep.subr.mxu0 0.0
        %324 = vmatpush1.msra.mxu0 0.0
        %325 = vmatprep.subr.mxu0 0.0
        %326 = vmatpush1.msra.mxu0 0.0
        %327 = vmatprep.subr.mxu0 0.0
        %328 = vmatpush1.msra.mxu0 0.0
        %329 = vmatprep.subr.mxu0 0.0
        %330 = vmatpush1.msra.mxu0 0.0
        %331 = vmatprep.subr.mxu0 0.0
        %332 = vmatpush1.msra.mxu0 0.0
        %333 = vmatprep.subr.mxu0 0.0
        %334 = vmatpush1.msra.mxu0 0.0
        %335 = vmatprep.subr.mxu0 0.0
        %336 = vmatpush1.msra.mxu0 0.0
        %337 = vmatprep.subr.mxu0 0.0
        %338 = vmatpush1.msra.mxu0 0.0
        %339 = vmatprep.subr.mxu0 0.0
        %340 = vmatpush1.msra.mxu0 0.0
        %341 = vmatprep.subr.mxu0 0.0
        %342 = vmatpush1.msra.mxu0 0.0
        %343 = vmatprep.subr.mxu0 0.0
        %344 = vmatpush1.msra.mxu0 0.0
        %345 = vmatprep.subr.mxu0 0.0
        %346 = vmatpush1.msra.mxu0 0.0
        %347 = vmatprep.subr.mxu0 0.0
        %348 = vmatpush1.msra.mxu0 0.0
        %349 = vmatprep.subr.mxu0 0.0
        %350 = vmatpush1.msra.mxu0 0.0
        %351 = vmatprep.mubr.f32.mxu0 0.0
        %352 = vmatmul.mubr.f32.gmra.mrb[0].mxu0 %v285
        %v353 = vpop.f32.mrb[0].mxu0
        %v354 = vadd.f32 0.0, %v353
        %v355 = vpop.f32.mrb[0].mxu0
        %356 = vdwg.mxu0
        %v357 = vld [vmem:[%s3] sm:$0xff]
        %v358 = vld [vmem:[%s3 + $0x8] sm:$0xff]
        %v359 = vld [vmem:[%s3 + $0x10] sm:$0xff]
        %v360 = vld [vmem:[%s3 + $0x18] sm:$0xff]
        %vm361 = vcmask 261120
        %v363 = vsel %vm361, %v354, 0
        %365 = vmatprep.subr.mxu0 0.0
        %366 = vmatpush1.msra.mxu0 %v357
        %367 = vmatprep.subr.mxu0 0.0
        %368 = vmatpush1.msra.mxu0 %v358
        %369 = vmatprep.subr.mxu0 0.0
        %370 = vmatpush1.msra.mxu0 %v359
        %371 = vmatprep.subr.mxu0 0.0
        %372 = vmatpush1.msra.mxu0 %v360
        %373 = vmatprep.subr.mxu0 0.0
        %374 = vmatpush1.msra.mxu0 0.0
        %375 = vmatprep.subr.mxu0 0.0
        %376 = vmatpush1.msra.mxu0 0.0
        %377 = vmatprep.subr.mxu0 0.0
        %378 = vmatpush1.msra.mxu0 0.0
        %379 = vmatprep.subr.mxu0 0.0
        %380 = vmatpush1.msra.mxu0 0.0
        %381 = vmatprep.subr.mxu0 0.0
        %382 = vmatpush1.msra.mxu0 0.0
        %383 = vmatprep.subr.mxu0 0.0
        %384 = vmatpush1.msra.mxu0 0.0
        %385 = vmatprep.subr.mxu0 0.0
        %386 = vmatpush1.msra.mxu0 0.0
        %387 = vmatprep.subr.mxu0 0.0
        %388 = vmatpush1.msra.mxu0 0.0
        %389 = vmatprep.subr.mxu0 0.0
        %390 = vmatpush1.msra.mxu0 0.0
        %391 = vmatprep.subr.mxu0 0.0
        %392 = vmatpush1.msra.mxu0 0.0
        %393 = vmatprep.subr.mxu0 0.0
        %394 = vmatpush1.msra.mxu0 0.0
        %395 = vmatprep.subr.mxu0 0.0
        %396 = vmatpush1.msra.mxu0 0.0
        %397 = vmatprep.subr.mxu0 0.0
        %398 = vmatpush1.msra.mxu0 0.0
        %399 = vmatprep.subr.mxu0 0.0
        %400 = vmatpush1.msra.mxu0 0.0
        %401 = vmatprep.subr.mxu0 0.0
        %402 = vmatpush1.msra.mxu0 0.0
        %403 = vmatprep.subr.mxu0 0.0
        %404 = vmatpush1.msra.mxu0 0.0
        %405 = vmatprep.subr.mxu0 0.0
        %406 = vmatpush1.msra.mxu0 0.0
        %407 = vmatprep.subr.mxu0 0.0
        %408 = vmatpush1.msra.mxu0 0.0
        %409 = vmatprep.subr.mxu0 0.0
        %410 = vmatpush1.msra.mxu0 0.0
        %411 = vmatprep.subr.mxu0 0.0
        %412 = vmatpush1.msra.mxu0 0.0
        %413 = vmatprep.subr.mxu0 0.0
        %414 = vmatpush1.msra.mxu0 0.0
        %415 = vmatprep.subr.mxu0 0.0
        %416 = vmatpush1.msra.mxu0 0.0
        %417 = vmatprep.subr.mxu0 0.0
        %418 = vmatpush1.msra.mxu0 0.0
        %419 = vmatprep.subr.mxu0 0.0
        %420 = vmatpush1.msra.mxu0 0.0
        %421 = vmatprep.subr.mxu0 0.0
        %422 = vmatpush1.msra.mxu0 0.0
        %423 = vmatprep.subr.mxu0 0.0
        %424 = vmatpush1.msra.mxu0 0.0
        %425 = vmatprep.subr.mxu0 0.0
        %426 = vmatpush1.msra.mxu0 0.0
        %427 = vmatprep.subr.mxu0 0.0
        %428 = vmatpush1.msra.mxu0 0.0
        %429 = vmatprep.mubr.f32.mxu0 0.0
        %430 = vmatmul.mubr.f32.gmra.mrb[0].mxu0 %v363
        %v431 = vpop.f32.mrb[0].mxu0
        %v432 = vadd.f32 0.0, %v431
        %v433 = vpop.f32.mrb[0].mxu0
        %434 = vdwg.mxu0
        %436 = vrot.lane.b32.xlu0 %v432, 124
        %v437 = vpop.permute.xlu0 %436
        %439 = vxpose.xlu0.b32.start [1/16] %v437, 128
        %440 = vxpose.xlu0.b32.cont [2/16] 0.0, 128
        %441 = vxpose.xlu0.b32.cont [3/16] 0.0, 128
        %442 = vxpose.xlu0.b32.cont [4/16] 0.0, 128
        %443 = vxpose.xlu0.b32.cont [5/16] 0.0, 128
        %444 = vxpose.xlu0.b32.cont [6/16] 0.0, 128
        %445 = vxpose.xlu0.b32.cont [7/16] 0.0, 128
        %446 = vxpose.xlu0.b32.cont [8/16] 0.0, 128
        %447 = vxpose.xlu0.b32.cont [9/16] 0.0, 128
        %448 = vxpose.xlu0.b32.cont [10/16] 0.0, 128
        %449 = vxpose.xlu0.b32.cont [11/16] 0.0, 128
        %450 = vxpose.xlu0.b32.cont [12/16] 0.0, 128
        %451 = vxpose.xlu0.b32.cont [13/16] 0.0, 128
        %452 = vxpose.xlu0.b32.cont [14/16] 0.0, 128
        %453 = vxpose.xlu0.b32.cont [15/16] 0.0, 128
        %454 = vxpose.xlu0.b32.end [16/16] 0.0, 128
        %v455 = vpop.trf.xlu0
        %v456 = vpop.trf.xlu0
        %v457 = vpop.trf.xlu0
        %v458 = vpop.trf.xlu0
        %v459 = vpop.trf.xlu0
        %v460 = vpop.trf.xlu0
        %v461 = vpop.trf.xlu0
        %v462 = vpop.trf.xlu0
        %v463 = vpop.trf.xlu0
        %v464 = vpop.trf.xlu0
        %v465 = vpop.trf.xlu0
        %v466 = vpop.trf.xlu0
        %v467 = vpop.trf.xlu0
        %v468 = vpop.trf.xlu0
        %v469 = vpop.trf.xlu0
        %v470 = vpop.trf.xlu0
        %471 = vset.pattern.permute.xlu0 0
        %472 = vperm.xlu0 %471, %v432
        %v473 = vpop.permute.xlu0 %472
        %v475 = vlaneseq
        %v476 = vshrl.u32 %v475, 7
        %v477 = vsub.s32 0, %v476
        %v478 = vrot.slane %v455, %v477
        %v479 = vadd.f32 %v473, %v478
        %vm480 = vcmp.gt.f32.partialorder %v479, 0.0
        %v481 = vmul.f32 %v479, 0.2
        %v482 = vsel %vm480, %v479, %v481
        %v483 = vadd.f32 %v482, %v280
        %vm484 = vcmask 64512
        %v485 = vsel %vm484, %v483, -inf
        %486 = vmax.xlane.f32.xlu0 %v485
        %v487 = vpop.xlane.xlu0 %486
        %v488 = vsub.f32 %v483, %v487
        %v489 = vmul.f32 %v488, 1.442695
        %v490 = vpow.pop %v489
        %v491 = vsel %vm484, %v490, 0.0
        %492 = vadd.xlane.f32.xlu0 %v491
        %v493 = vpop.xlane.xlu0 %492
        %v494 = vrcp.pop %v493
        %v495 = vmul.f32 %v490, %v494
        %v497 = vsel %vm484, %v495, 0
        %499 = vmatprep.subr.mxu0 0.0
        %500 = vmatpush1.msra.mxu0 %v354
        %501 = vmatprep.subr.mxu0 0.0
        %502 = vmatpush1.msra.mxu0 0.0
        %503 = vmatprep.subr.mxu0 0.0
        %504 = vmatpush1.msra.mxu0 0.0
        %505 = vmatprep.subr.mxu0 0.0
        %506 = vmatpush1.msra.mxu0 0.0
        %507 = vmatprep.subr.mxu0 0.0
        %508 = vmatpush1.msra.mxu0 0.0
        %509 = vmatprep.subr.mxu0 0.0
        %510 = vmatpush1.msra.mxu0 0.0
        %511 = vmatprep.subr.mxu0 0.0
        %512 = vmatpush1.msra.mxu0 0.0
        %513 = vmatprep.subr.mxu0 0.0
        %514 = vmatpush1.msra.mxu0 0.0
        %515 = vmatprep.subr.mxu0 0.0
        %516 = vmatpush1.msra.mxu0 0.0
        %517 = vmatprep.subr.mxu0 0.0
        %518 = vmatpush1.msra.mxu0 0.0
        %519 = vmatprep.subr.mxu0 0.0
        %520 = vmatpush1.msra.mxu0 0.0
        %521 = vmatprep.subr.mxu0 0.0
        %522 = vmatpush1.msra.mxu0 0.0
        %523 = vmatprep.subr.mxu0 0.0
        %524 = vmatpush1.msra.mxu0 0.0
        %525 = vmatprep.subr.mxu0 0.0
        %526 = vmatpush1.msra.mxu0 0.0
        %527 = vmatprep.subr.mxu0 0.0
        %528 = vmatpush1.msra.mxu0 0.0
        %529 = vmatprep.subr.mxu0 0.0
        %530 = vmatpush1.msra.mxu0 0.0
        %531 = vmatprep.subr.mxu0 0.0
        %532 = vmatpush1.msra.mxu0 0.0
        %533 = vmatprep.subr.mxu0 0.0
        %534 = vmatpush1.msra.mxu0 0.0
        %535 = vmatprep.subr.mxu0 0.0
        %536 = vmatpush1.msra.mxu0 0.0
        %537 = vmatprep.subr.mxu0 0.0
        %538 = vmatpush1.msra.mxu0 0.0
        %539 = vmatprep.subr.mxu0 0.0
        %540 = vmatpush1.msra.mxu0 0.0
        %541 = vmatprep.subr.mxu0 0.0
        %542 = vmatpush1.msra.mxu0 0.0
        %543 = vmatprep.subr.mxu0 0.0
        %544 = vmatpush1.msra.mxu0 0.0
        %545 = vmatprep.subr.mxu0 0.0
        %546 = vmatpush1.msra.mxu0 0.0
        %547 = vmatprep.subr.mxu0 0.0
        %548 = vmatpush1.msra.mxu0 0.0
        %549 = vmatprep.subr.mxu0 0.0
        %550 = vmatpush1.msra.mxu0 0.0
        %551 = vmatprep.subr.mxu0 0.0
        %552 = vmatpush1.msra.mxu0 0.0
        %553 = vmatprep.subr.mxu0 0.0
        %554 = vmatpush1.msra.mxu0 0.0
        %555 = vmatprep.subr.mxu0 0.0
        %556 = vmatpush1.msra.mxu0 0.0
        %557 = vmatprep.subr.mxu0 0.0
        %558 = vmatpush1.msra.mxu0 0.0
        %559 = vmatprep.subr.mxu0 0.0
        %560 = vmatpush1.msra.mxu0 0.0
        %561 = vmatprep.subr.mxu0 0.0
        %562 = vmatpush1.msra.mxu0 0.0
        %563 = vmatprep.mubr.f32.mxu0 0.0
        %564 = vmatmul.mubr.f32.gmra.mrb[0].mxu0 %v497
        %v565 = vpop.f32.mrb[0].mxu0
        %v566 = vadd.f32 0.0, %v565
        %v567 = vpop.f32.mrb[0].mxu0
        %568 = vdwg.mxu0
        %v569 = vld [vmem:[%s4] sm:$0xff]
        %v570 = vld [vmem:[%s5] sm:$0x1]
        %v572 = vlaneseq
        %v573 = vshrl.u32 %v572, 7
        %v574 = vsub.s32 0, %v573
        %v575 = vrot.slane %v570, %v574
        %v578 = vsel %vm484, %v566, 0
        %580 = vmatprep.subr.mxu0 0.0
        %581 = vmatpush1.msra.mxu0 %v569
        %582 = vmatprep.subr.mxu0 0.0
        %583 = vmatpush1.msra.mxu0 0.0
        %584 = vmatprep.subr.mxu0 0.0
        %585 = vmatpush1.msra.mxu0 0.0
        %586 = vmatprep.subr.mxu0 0.0
        %587 = vmatpush1.msra.mxu0 0.0
        %588 = vmatprep.subr.mxu0 0.0
        %589 = vmatpush1.msra.mxu0 0.0
        %590 = vmatprep.subr.mxu0 0.0
        %591 = vmatpush1.msra.mxu0 0.0
        %592 = vmatprep.subr.mxu0 0.0
        %593 = vmatpush1.msra.mxu0 0.0
        %594 = vmatprep.subr.mxu0 0.0
        %595 = vmatpush1.msra.mxu0 0.0
        %596 = vmatprep.subr.mxu0 0.0
        %597 = vmatpush1.msra.mxu0 0.0
        %598 = vmatprep.subr.mxu0 0.0
        %599 = vmatpush1.msra.mxu0 0.0
        %600 = vmatprep.subr.mxu0 0.0
        %601 = vmatpush1.msra.mxu0 0.0
        %602 = vmatprep.subr.mxu0 0.0
        %603 = vmatpush1.msra.mxu0 0.0
        %604 = vmatprep.subr.mxu0 0.0
        %605 = vmatpush1.msra.mxu0 0.0
        %606 = vmatprep.subr.mxu0 0.0
        %607 = vmatpush1.msra.mxu0 0.0
        %608 = vmatprep.subr.mxu0 0.0
        %609 = vmatpush1.msra.mxu0 0.0
        %610 = vmatprep.subr.mxu0 0.0
        %611 = vmatpush1.msra.mxu0 0.0
        %612 = vmatprep.subr.mxu0 0.0
        %613 = vmatpush1.msra.mxu0 0.0
        %614 = vmatprep.subr.mxu0 0.0
        %615 = vmatpush1.msra.mxu0 0.0
        %616 = vmatprep.subr.mxu0 0.0
        %617 = vmatpush1.msra.mxu0 0.0
        %618 = vmatprep.subr.mxu0 0.0
        %619 = vmatpush1.msra.mxu0 0.0
        %620 = vmatprep.subr.mxu0 0.0
        %621 = vmatpush1.msra.mxu0 0.0
        %622 = vmatprep.subr.mxu0 0.0
        %623 = vmatpush1.msra.mxu0 0.0
        %624 = vmatprep.subr.mxu0 0.0
        %625 = vmatpush1.msra.mxu0 0.0
        %626 = vmatprep.subr.mxu0 0.0
        %627 = vmatpush1.msra.mxu0 0.0
        %628 = vmatprep.subr.mxu0 0.0
        %629 = vmatpush1.msra.mxu0 0.0
        %630 = vmatprep.subr.mxu0 0.0
        %631 = vmatpush1.msra.mxu0 0.0
        %632 = vmatprep.subr.mxu0 0.0
        %633 = vmatpush1.msra.mxu0 0.0
        %634 = vmatprep.subr.mxu0 0.0
        %635 = vmatpush1.msra.mxu0 0.0
        %636 = vmatprep.subr.mxu0 0.0
        %637 = vmatpush1.msra.mxu0 0.0
        %638 = vmatprep.subr.mxu0 0.0
        %639 = vmatpush1.msra.mxu0 0.0
        %640 = vmatprep.subr.mxu0 0.0
        %641 = vmatpush1.msra.mxu0 0.0
        %642 = vmatprep.subr.mxu0 0.0
        %643 = vmatpush1.msra.mxu0 0.0
        %644 = vmatprep.mubr.f32.mxu0 0.0
        %645 = vmatmul.mubr.f32.gmra.mrb[0].mxu0 %v578
        %v646 = vpop.f32.mrb[0].mxu0
        %v647 = vadd.f32 %v575, %v646
        %v648 = vpop.f32.mrb[0].mxu0
        %649 = vdwg.mxu0
        %v650 = vsub.f32 0.0, %v647
        %v651 = vmul.f32 %v650, 1.442695
        %v652 = vpow.pop %v651
        %v653 = vadd.f32 %v652, 1.0
        %v654 = vrcp.pop %v653
        %v655 = vmul.f32 %v566, %v654
        %656 = vst.msk [vmem:[%s270] sm:$0xff] %vm484, %v655
        %657 = vrot.lane.b32.xlu0 %v432, 123
        %v658 = vpop.permute.xlu0 %657
        %660 = vxpose.xlu0.b32.start [1/16] %v658, 128
        %661 = vxpose.xlu0.b32.cont [2/16] 0.0, 128
        %662 = vxpose.xlu0.b32.cont [3/16] 0.0, 128
        %663 = vxpose.xlu0.b32.cont [4/16] 0.0, 128
        %664 = vxpose.xlu0.b32.cont [5/16] 0.0, 128
        %665 = vxpose.xlu0.b32.cont [6/16] 0.0, 128
        %666 = vxpose.xlu0.b32.cont [7/16] 0.0, 128
        %667 = vxpose.xlu0.b32.cont [8/16] 0.0, 128
        %668 = vxpose.xlu0.b32.cont [9/16] 0.0, 128
        %669 = vxpose.xlu0.b32.cont [10/16] 0.0, 128
        %670 = vxpose.xlu0.b32.cont [11/16] 0.0, 128
        %671 = vxpose.xlu0.b32.cont [12/16] 0.0, 128
        %672 = vxpose.xlu0.b32.cont [13/16] 0.0, 128
        %673 = vxpose.xlu0.b32.cont [14/16] 0.0, 128
        %674 = vxpose.xlu0.b32.cont [15/16] 0.0, 128
        %675 = vxpose.xlu0.b32.end [16/16] 0.0, 128
        %v676 = vpop.trf.xlu0
        %v677 = vpop.trf.xlu0
        %v678 = vpop.trf.xlu0
        %v679 = vpop.trf.xlu0
        %v680 = vpop.trf.xlu0
        %v681 = vpop.trf.xlu0
        %v682 = vpop.trf.xlu0
        %v683 = vpop.trf.xlu0
        %v684 = vpop.trf.xlu0
        %v685 = vpop.trf.xlu0
        %v686 = vpop.trf.xlu0
        %v687 = vpop.trf.xlu0
        %v688 = vpop.trf.xlu0
        %v689 = vpop.trf.xlu0
        %v690 = vpop.trf.xlu0
        %v691 = vpop.trf.xlu0
        %692 = vset.pattern.permute.xlu0 1
        %693 = vperm.xlu0 %692, %v432
        %v694 = vpop.permute.xlu0 %693
        %v696 = vlaneseq
        %v697 = vshrl.u32 %v696, 7
        %v698 = vsub.s32 0, %v697
        %v699 = vrot.slane %v676, %v698
        %v700 = vadd.f32 %v694, %v699
        %vm701 = vcmp.gt.f32.partialorder %v700, 0.0
        %v702 = vmul.f32 %v700, 0.2
        %v703 = vsel %vm701, %v700, %v702
        %v704 = vadd.f32 %v703, %v280
        %v705 = vsel %vm484, %v704, -inf
        %706 = vmax.xlane.f32.xlu0 %v705
        %v707 = vpop.xlane.xlu0 %706
        %v708 = vsub.f32 %v704, %v707
        %v709 = vmul.f32 %v708, 1.442695
        %v710 = vpow.pop %v709
        %v711 = vsel %vm484, %v710, 0.0
        %712 = vadd.xlane.f32.xlu0 %v711
        %v713 = vpop.xlane.xlu0 %712
        %v714 = vrcp.pop %v713
        %v715 = vmul.f32 %v710, %v714
        %716 = vrot.lane.b32.xlu0 %v354, 120
        %v717 = vpop.permute.xlu0 %716
        %v720 = vsel %vm484, %v715, 0
        %722 = vmatprep.subr.mxu0 0.0
        %723 = vmatpush1.msra.mxu0 %v717
        %724 = vmatprep.subr.mxu0 0.0
        %725 = vmatpush1.msra.mxu0 0.0
        %726 = vmatprep.subr.mxu0 0.0
        %727 = vmatpush1.msra.mxu0 0.0
        %728 = vmatprep.subr.mxu0 0.0
        %729 = vmatpush1.msra.mxu0 0.0
        %730 = vmatprep.subr.mxu0 0.0
        %731 = vmatpush1.msra.mxu0 0.0
        %732 = vmatprep.subr.mxu0 0.0
        %733 = vmatpush1.msra.mxu0 0.0
        %734 = vmatprep.subr.mxu0 0.0
        %735 = vmatpush1.msra.mxu0 0.0
        %736 = vmatprep.subr.mxu0 0.0
        %737 = vmatpush1.msra.mxu0 0.0
        %738 = vmatprep.subr.mxu0 0.0
        %739 = vmatpush1.msra.mxu0 0.0
        %740 = vmatprep.subr.mxu0 0.0
        %741 = vmatpush1.msra.mxu0 0.0
        %742 = vmatprep.subr.mxu0 0.0
        %743 = vmatpush1.msra.mxu0 0.0
        %744 = vmatprep.subr.mxu0 0.0
        %745 = vmatpush1.msra.mxu0 0.0
        %746 = vmatprep.subr.mxu0 0.0
        %747 = vmatpush1.msra.mxu0 0.0
        %748 = vmatprep.subr.mxu0 0.0
        %749 = vmatpush1.msra.mxu0 0.0
        %750 = vmatprep.subr.mxu0 0.0
        %751 = vmatpush1.msra.mxu0 0.0
        %752 = vmatprep.subr.mxu0 0.0
        %753 = vmatpush1.msra.mxu0 0.0
        %754 = vmatprep.subr.mxu0 0.0
        %755 = vmatpush1.msra.mxu0 0.0
        %756 = vmatprep.subr.mxu0 0.0
        %757 = vmatpush1.msra.mxu0 0.0
        %758 = vmatprep.subr.mxu0 0.0
        %759 = vmatpush1.msra.mxu0 0.0
        %760 = vmatprep.subr.mxu0 0.0
        %761 = vmatpush1.msra.mxu0 0.0
        %762 = vmatprep.subr.mxu0 0.0
        %763 = vmatpush1.msra.mxu0 0.0
        %764 = vmatprep.subr.mxu0 0.0
        %765 = vmatpush1.msra.mxu0 0.0
        %766 = vmatprep.subr.mxu0 0.0
        %767 = vmatpush1.msra.mxu0 0.0
        %768 = vmatprep.subr.mxu0 0.0
        %769 = vmatpush1.msra.mxu0 0.0
        %770 = vmatprep.subr.mxu0 0.0
        %771 = vmatpush1.msra.mxu0 0.0
        %772 = vmatprep.subr.mxu0 0.0
        %773 = vmatpush1.msra.mxu0 0.0
        %774 = vmatprep.subr.mxu0 0.0
        %775 = vmatpush1.msra.mxu0 0.0
        %776 = vmatprep.subr.mxu0 0.0
        %777 = vmatpush1.msra.mxu0 0.0
        %778 = vmatprep.subr.mxu0 0.0
        %779 = vmatpush1.msra.mxu0 0.0
        %780 = vmatprep.subr.mxu0 0.0
        %781 = vmatpush1.msra.mxu0 0.0
        %782 = vmatprep.subr.mxu0 0.0
        %783 = vmatpush1.msra.mxu0 0.0
        %784 = vmatprep.subr.mxu0 0.0
        %785 = vmatpush1.msra.mxu0 0.0
        %786 = vmatprep.mubr.f32.mxu0 0.0
        %787 = vmatmul.mubr.f32.gmra.mrb[0].mxu0 %v720
        %v788 = vpop.f32.mrb[0].mxu0
        %v789 = vadd.f32 0.0, %v788
        %v790 = vpop.f32.mrb[0].mxu0
        %791 = vdwg.mxu0
        %v792 = vld [vmem:[%s4] sm:$0xff]
        %v793 = vld [vmem:[%s5] sm:$0x1]
        %v795 = vlaneseq
        %v796 = vshrl.u32 %v795, 7
        %v797 = vsub.s32 0, %v796
        %v798 = vrot.slane %v793, %v797
        %v801 = vsel %vm484, %v789, 0
        %803 = vmatprep.subr.mxu0 0.0
        %804 = vmatpush1.msra.mxu0 %v792
        %805 = vmatprep.subr.mxu0 0.0
        %806 = vmatpush1.msra.mxu0 0.0
        %807 = vmatprep.subr.mxu0 0.0
        %808 = vmatpush1.msra.mxu0 0.0
        %809 = vmatprep.subr.mxu0 0.0
        %810 = vmatpush1.msra.mxu0 0.0
        %811 = vmatprep.subr.mxu0 0.0
        %812 = vmatpush1.msra.mxu0 0.0
        %813 = vmatprep.subr.mxu0 0.0
        %814 = vmatpush1.msra.mxu0 0.0
        %815 = vmatprep.subr.mxu0 0.0
        %816 = vmatpush1.msra.mxu0 0.0
        %817 = vmatprep.subr.mxu0 0.0
        %818 = vmatpush1.msra.mxu0 0.0
        %819 = vmatprep.subr.mxu0 0.0
        %820 = vmatpush1.msra.mxu0 0.0
        %821 = vmatprep.subr.mxu0 0.0
        %822 = vmatpush1.msra.mxu0 0.0
        %823 = vmatprep.subr.mxu0 0.0
        %824 = vmatpush1.msra.mxu0 0.0
        %825 = vmatprep.subr.mxu0 0.0
        %826 = vmatpush1.msra.mxu0 0.0
        %827 = vmatprep.subr.mxu0 0.0
        %828 = vmatpush1.msra.mxu0 0.0
        %829 = vmatprep.subr.mxu0 0.0
        %830 = vmatpush1.msra.mxu0 0.0
        %831 = vmatprep.subr.mxu0 0.0
        %832 = vmatpush1.msra.mxu0 0.0
        %833 = vmatprep.subr.mxu0 0.0
        %834 = vmatpush1.msra.mxu0 0.0
        %835 = vmatprep.subr.mxu0 0.0
        %836 = vmatpush1.msra.mxu0 0.0
        %837 = vmatprep.subr.mxu0 0.0
        %838 = vmatpush1.msra.mxu0 0.0
        %839 = vmatprep.subr.mxu0 0.0
        %840 = vmatpush1.msra.mxu0 0.0
        %841 = vmatprep.subr.mxu0 0.0
        %842 = vmatpush1.msra.mxu0 0.0
        %843 = vmatprep.subr.mxu0 0.0
        %844 = vmatpush1.msra.mxu0 0.0
        %845 = vmatprep.subr.mxu0 0.0
        %846 = vmatpush1.msra.mxu0 0.0
        %847 = vmatprep.subr.mxu0 0.0
        %848 = vmatpush1.msra.mxu0 0.0
        %849 = vmatprep.subr.mxu0 0.0
        %850 = vmatpush1.msra.mxu0 0.0
        %851 = vmatprep.subr.mxu0 0.0
        %852 = vmatpush1.msra.mxu0 0.0
        %853 = vmatprep.subr.mxu0 0.0
        %854 = vmatpush1.msra.mxu0 0.0
        %855 = vmatprep.subr.mxu0 0.0
        %856 = vmatpush1.msra.mxu0 0.0
        %857 = vmatprep.subr.mxu0 0.0
        %858 = vmatpush1.msra.mxu0 0.0
        %859 = vmatprep.subr.mxu0 0.0
        %860 = vmatpush1.msra.mxu0 0.0
        %861 = vmatprep.subr.mxu0 0.0
        %862 = vmatpush1.msra.mxu0 0.0
        %863 = vmatprep.subr.mxu0 0.0
        %864 = vmatpush1.msra.mxu0 0.0
        %865 = vmatprep.subr.mxu0 0.0
        %866 = vmatpush1.msra.mxu0 0.0
        %867 = vmatprep.mubr.f32.mxu0 0.0
        %868 = vmatmul.mubr.f32.gmra.mrb[0].mxu0 %v801
        %v869 = vpop.f32.mrb[0].mxu0
        %v870 = vadd.f32 %v798, %v869
        %v871 = vpop.f32.mrb[0].mxu0
        %872 = vdwg.mxu0
        %v873 = vsub.f32 0.0, %v870
        %v874 = vmul.f32 %v873, 1.442695
        %v875 = vpow.pop %v874
        %v876 = vadd.f32 %v875, 1.0
        %v877 = vrcp.pop %v876
        %v878 = vmul.f32 %v789, %v877
        %880 = vrot.lane.b32.xlu0 %v878, 8
        %v881 = vpop.permute.xlu0 %880
        %vm883 = vcmask 130112
        %884 = vst.msk [vmem:[%s270] sm:$0xff] %vm883, %v881
        %885 = vrot.lane.b32.xlu0 %v432, 122
        %v886 = vpop.permute.xlu0 %885
        %888 = vxpose.xlu0.b32.start [1/16] %v886, 128
        %889 = vxpose.xlu0.b32.cont [2/16] 0.0, 128
        %890 = vxpose.xlu0.b32.cont [3/16] 0.0, 128
        %891 = vxpose.xlu0.b32.cont [4/16] 0.0, 128
        %892 = vxpose.xlu0.b32.cont [5/16] 0.0, 128
        %893 = vxpose.xlu0.b32.cont [6/16] 0.0, 128
        %894 = vxpose.xlu0.b32.cont [7/16] 0.0, 128
        %895 = vxpose.xlu0.b32.cont [8/16] 0.0, 128
        %896 = vxpose.xlu0.b32.cont [9/16] 0.0, 128
        %897 = vxpose.xlu0.b32.cont [10/16] 0.0, 128
        %898 = vxpose.xlu0.b32.cont [11/16] 0.0, 128
        %899 = vxpose.xlu0.b32.cont [12/16] 0.0, 128
        %900 = vxpose.xlu0.b32.cont [13/16] 0.0, 128
        %901 = vxpose.xlu0.b32.cont [14/16] 0.0, 128
        %902 = vxpose.xlu0.b32.cont [15/16] 0.0, 128
        %903 = vxpose.xlu0.b32.end [16/16] 0.0, 128
        %v904 = vpop.trf.xlu0
        %v905 = vpop.trf.xlu0
        %v906 = vpop.trf.xlu0
        %v907 = vpop.trf.xlu0
        %v908 = vpop.trf.xlu0
        %v909 = vpop.trf.xlu0
        %v910 = vpop.trf.xlu0
        %v911 = vpop.trf.xlu0
        %v912 = vpop.trf.xlu0
        %v913 = vpop.trf.xlu0
        %v914 = vpop.trf.xlu0
        %v915 = vpop.trf.xlu0
        %v916 = vpop.trf.xlu0
        %v917 = vpop.trf.xlu0
        %v918 = vpop.trf.xlu0
        %v919 = vpop.trf.xlu0
        %920 = vset.pattern.permute.xlu0 2
        %921 = vperm.xlu0 %920, %v432
        %v922 = vpop.permute.xlu0 %921
        %v924 = vlaneseq
        %v925 = vshrl.u32 %v924, 7
        %v926 = vsub.s32 0, %v925
        %v927 = vrot.slane %v904, %v926
        %v928 = vadd.f32 %v922, %v927
        %vm929 = vcmp.gt.f32.partialorder %v928, 0.0
        %v930 = vmul.f32 %v928, 0.2
        %v931 = vsel %vm929, %v928, %v930
        %v932 = vadd.f32 %v931, %v280
        %v933 = vsel %vm484, %v932, -inf
        %934 = vmax.xlane.f32.xlu0 %v933
        %v935 = vpop.xlane.xlu0 %934
        %v936 = vsub.f32 %v932, %v935
        %v937 = vmul.f32 %v936, 1.442695
        %v938 = vpow.pop %v937
        %v939 = vsel %vm484, %v938, 0.0
        %940 = vadd.xlane.f32.xlu0 %v939
        %v941 = vpop.xlane.xlu0 %940
        %v942 = vrcp.pop %v941
        %v943 = vmul.f32 %v938, %v942
        %944 = vrot.lane.b32.xlu0 %v354, 112
        %v945 = vpop.permute.xlu0 %944
        %v948 = vsel %vm484, %v943, 0
        %950 = vmatprep.subr.mxu0 0.0
        %951 = vmatpush1.msra.mxu0 %v945
        %952 = vmatprep.subr.mxu0 0.0
        %953 = vmatpush1.msra.mxu0 0.0
        %954 = vmatprep.subr.mxu0 0.0
        %955 = vmatpush1.msra.mxu0 0.0
        %956 = vmatprep.subr.mxu0 0.0
        %957 = vmatpush1.msra.mxu0 0.0
        %958 = vmatprep.subr.mxu0 0.0
        %959 = vmatpush1.msra.mxu0 0.0
        %960 = vmatprep.subr.mxu0 0.0
        %961 = vmatpush1.msra.mxu0 0.0
        %962 = vmatprep.subr.mxu0 0.0
        %963 = vmatpush1.msra.mxu0 0.0
        %964 = vmatprep.subr.mxu0 0.0
        %965 = vmatpush1.msra.mxu0 0.0
        %966 = vmatprep.subr.mxu0 0.0
        %967 = vmatpush1.msra.mxu0 0.0
        %968 = vmatprep.subr.mxu0 0.0
        %969 = vmatpush1.msra.mxu0 0.0
        %970 = vmatprep.subr.mxu0 0.0
        %971 = vmatpush1.msra.mxu0 0.0
        %972 = vmatprep.subr.mxu0 0.0
        %973 = vmatpush1.msra.mxu0 0.0
        %974 = vmatprep.subr.mxu0 0.0
        %975 = vmatpush1.msra.mxu0 0.0
        %976 = vmatprep.subr.mxu0 0.0
        %977 = vmatpush1.msra.mxu0 0.0
        %978 = vmatprep.subr.mxu0 0.0
        %979 = vmatpush1.msra.mxu0 0.0
        %980 = vmatprep.subr.mxu0 0.0
        %981 = vmatpush1.msra.mxu0 0.0
        %982 = vmatprep.subr.mxu0 0.0
        %983 = vmatpush1.msra.mxu0 0.0
        %984 = vmatprep.subr.mxu0 0.0
        %985 = vmatpush1.msra.mxu0 0.0
        %986 = vmatprep.subr.mxu0 0.0
        %987 = vmatpush1.msra.mxu0 0.0
        %988 = vmatprep.subr.mxu0 0.0
        %989 = vmatpush1.msra.mxu0 0.0
        %990 = vmatprep.subr.mxu0 0.0
        %991 = vmatpush1.msra.mxu0 0.0
        %992 = vmatprep.subr.mxu0 0.0
        %993 = vmatpush1.msra.mxu0 0.0
        %994 = vmatprep.subr.mxu0 0.0
        %995 = vmatpush1.msra.mxu0 0.0
        %996 = vmatprep.subr.mxu0 0.0
        %997 = vmatpush1.msra.mxu0 0.0
        %998 = vmatprep.subr.mxu0 0.0
        %999 = vmatpush1.msra.mxu0 0.0
        %1000 = vmatprep.subr.mxu0 0.0
        %1001 = vmatpush1.msra.mxu0 0.0
        %1002 = vmatprep.subr.mxu0 0.0
        %1003 = vmatpush1.msra.mxu0 0.0
        %1004 = vmatprep.subr.mxu0 0.0
        %1005 = vmatpush1.msra.mxu0 0.0
        %1006 = vmatprep.subr.mxu0 0.0
        %1007 = vmatpush1.msra.mxu0 0.0
        %1008 = vmatprep.subr.mxu0 0.0
        %1009 = vmatpush1.msra.mxu0 0.0
        %1010 = vmatprep.subr.mxu0 0.0
        %1011 = vmatpush1.msra.mxu0 0.0
        %1012 = vmatprep.subr.mxu0 0.0
        %1013 = vmatpush1.msra.mxu0 0.0
        %1014 = vmatprep.mubr.f32.mxu0 0.0
        %1015 = vmatmul.mubr.f32.gmra.mrb[0].mxu0 %v948
        %v1016 = vpop.f32.mrb[0].mxu0
        %v1017 = vadd.f32 0.0, %v1016
        %v1018 = vpop.f32.mrb[0].mxu0
        %1019 = vdwg.mxu0
        %v1020 = vld [vmem:[%s4] sm:$0xff]
        %v1021 = vld [vmem:[%s5] sm:$0x1]
        %v1023 = vlaneseq
        %v1024 = vshrl.u32 %v1023, 7
        %v1025 = vsub.s32 0, %v1024
        %v1026 = vrot.slane %v1021, %v1025
        %v1029 = vsel %vm484, %v1017, 0
        %1031 = vmatprep.subr.mxu0 0.0
        %1032 = vmatpush1.msra.mxu0 %v1020
        %1033 = vmatprep.subr.mxu0 0.0
        %1034 = vmatpush1.msra.mxu0 0.0
        %1035 = vmatprep.subr.mxu0 0.0
        %1036 = vmatpush1.msra.mxu0 0.0
        %1037 = vmatprep.subr.mxu0 0.0
        %1038 = vmatpush1.msra.mxu0 0.0
        %1039 = vmatprep.subr.mxu0 0.0
        %1040 = vmatpush1.msra.mxu0 0.0
        %1041 = vmatprep.subr.mxu0 0.0
        %1042 = vmatpush1.msra.mxu0 0.0
        %1043 = vmatprep.subr.mxu0 0.0
        %1044 = vmatpush1.msra.mxu0 0.0
        %1045 = vmatprep.subr.mxu0 0.0
        %1046 = vmatpush1.msra.mxu0 0.0
        %1047 = vmatprep.subr.mxu0 0.0
        %1048 = vmatpush1.msra.mxu0 0.0
        %1049 = vmatprep.subr.mxu0 0.0
        %1050 = vmatpush1.msra.mxu0 0.0
        %1051 = vmatprep.subr.mxu0 0.0
        %1052 = vmatpush1.msra.mxu0 0.0
        %1053 = vmatprep.subr.mxu0 0.0
        %1054 = vmatpush1.msra.mxu0 0.0
        %1055 = vmatprep.subr.mxu0 0.0
        %1056 = vmatpush1.msra.mxu0 0.0
        %1057 = vmatprep.subr.mxu0 0.0
        %1058 = vmatpush1.msra.mxu0 0.0
        %1059 = vmatprep.subr.mxu0 0.0
        %1060 = vmatpush1.msra.mxu0 0.0
        %1061 = vmatprep.subr.mxu0 0.0
        %1062 = vmatpush1.msra.mxu0 0.0
        %1063 = vmatprep.subr.mxu0 0.0
        %1064 = vmatpush1.msra.mxu0 0.0
        %1065 = vmatprep.subr.mxu0 0.0
        %1066 = vmatpush1.msra.mxu0 0.0
        %1067 = vmatprep.subr.mxu0 0.0
        %1068 = vmatpush1.msra.mxu0 0.0
        %1069 = vmatprep.subr.mxu0 0.0
        %1070 = vmatpush1.msra.mxu0 0.0
        %1071 = vmatprep.subr.mxu0 0.0
        %1072 = vmatpush1.msra.mxu0 0.0
        %1073 = vmatprep.subr.mxu0 0.0
        %1074 = vmatpush1.msra.mxu0 0.0
        %1075 = vmatprep.subr.mxu0 0.0
        %1076 = vmatpush1.msra.mxu0 0.0
        %1077 = vmatprep.subr.mxu0 0.0
        %1078 = vmatpush1.msra.mxu0 0.0
        %1079 = vmatprep.subr.mxu0 0.0
        %1080 = vmatpush1.msra.mxu0 0.0
        %1081 = vmatprep.subr.mxu0 0.0
        %1082 = vmatpush1.msra.mxu0 0.0
        %1083 = vmatprep.subr.mxu0 0.0
        %1084 = vmatpush1.msra.mxu0 0.0
        %1085 = vmatprep.subr.mxu0 0.0
        %1086 = vmatpush1.msra.mxu0 0.0
        %1087 = vmatprep.subr.mxu0 0.0
        %1088 = vmatpush1.msra.mxu0 0.0
        %1089 = vmatprep.subr.mxu0 0.0
        %1090 = vmatpush1.msra.mxu0 0.0
        %1091 = vmatprep.subr.mxu0 0.0
        %1092 = vmatpush1.msra.mxu0 0.0
        %1093 = vmatprep.subr.mxu0 0.0
        %1094 = vmatpush1.msra.mxu0 0.0
        %1095 = vmatprep.mubr.f32.mxu0 0.0
        %1096 = vmatmul.mubr.f32.gmra.mrb[0].mxu0 %v1029
        %v1097 = vpop.f32.mrb[0].mxu0
        %v1098 = vadd.f32 %v1026, %v1097
        %v1099 = vpop.f32.mrb[0].mxu0
        %1100 = vdwg.mxu0
        %v1101 = vsub.f32 0.0, %v1098
        %v1102 = vmul.f32 %v1101, 1.442695
        %v1103 = vpow.pop %v1102
        %v1104 = vadd.f32 %v1103, 1.0
        %v1105 = vrcp.pop %v1104
        %v1106 = vmul.f32 %v1017, %v1105
        %1108 = vrot.lane.b32.xlu0 %v1106, 16
        %v1109 = vpop.permute.xlu0 %1108
        %vm1111 = vcmask 195712
        %1112 = vst.msk [vmem:[%s270] sm:$0xff] %vm1111, %v1109
        %1113 = vrot.lane.b32.xlu0 %v432, 121
        %v1114 = vpop.permute.xlu0 %1113
        %1116 = vxpose.xlu0.b32.start [1/16] %v1114, 128
        %1117 = vxpose.xlu0.b32.cont [2/16] 0.0, 128
        %1118 = vxpose.xlu0.b32.cont [3/16] 0.0, 128
        %1119 = vxpose.xlu0.b32.cont [4/16] 0.0, 128
        %1120 = vxpose.xlu0.b32.cont [5/16] 0.0, 128
        %1121 = vxpose.xlu0.b32.cont [6/16] 0.0, 128
        %1122 = vxpose.xlu0.b32.cont [7/16] 0.0, 128
        %1123 = vxpose.xlu0.b32.cont [8/16] 0.0, 128
        %1124 = vxpose.xlu0.b32.cont [9/16] 0.0, 128
        %1125 = vxpose.xlu0.b32.cont [10/16] 0.0, 128
        %1126 = vxpose.xlu0.b32.cont [11/16] 0.0, 128
        %1127 = vxpose.xlu0.b32.cont [12/16] 0.0, 128
        %1128 = vxpose.xlu0.b32.cont [13/16] 0.0, 128
        %1129 = vxpose.xlu0.b32.cont [14/16] 0.0, 128
        %1130 = vxpose.xlu0.b32.cont [15/16] 0.0, 128
        %1131 = vxpose.xlu0.b32.end [16/16] 0.0, 128
        %v1132 = vpop.trf.xlu0
        %v1133 = vpop.trf.xlu0
        %v1134 = vpop.trf.xlu0
        %v1135 = vpop.trf.xlu0
        %v1136 = vpop.trf.xlu0
        %v1137 = vpop.trf.xlu0
        %v1138 = vpop.trf.xlu0
        %v1139 = vpop.trf.xlu0
        %v1140 = vpop.trf.xlu0
        %v1141 = vpop.trf.xlu0
        %v1142 = vpop.trf.xlu0
        %v1143 = vpop.trf.xlu0
        %v1144 = vpop.trf.xlu0
        %v1145 = vpop.trf.xlu0
        %v1146 = vpop.trf.xlu0
        %v1147 = vpop.trf.xlu0
        %1148 = vset.pattern.permute.xlu0 3
        %1149 = vperm.xlu0 %1148, %v432
        %v1150 = vpop.permute.xlu0 %1149
        %v1152 = vlaneseq
        %v1153 = vshrl.u32 %v1152, 7
        %v1154 = vsub.s32 0, %v1153
        %v1155 = vrot.slane %v1132, %v1154
        %v1156 = vadd.f32 %v1150, %v1155
        %vm1157 = vcmp.gt.f32.partialorder %v1156, 0.0
        %v1158 = vmul.f32 %v1156, 0.2
        %v1159 = vsel %vm1157, %v1156, %v1158
        %v1160 = vadd.f32 %v1159, %v280
        %v1161 = vsel %vm484, %v1160, -inf
        %1162 = vmax.xlane.f32.xlu0 %v1161
        %v1163 = vpop.xlane.xlu0 %1162
        %v1164 = vsub.f32 %v1160, %v1163
        %v1165 = vmul.f32 %v1164, 1.442695
        %v1166 = vpow.pop %v1165
        %v1167 = vsel %vm484, %v1166, 0.0
        %1168 = vadd.xlane.f32.xlu0 %v1167
        %v1169 = vpop.xlane.xlu0 %1168
        %v1170 = vrcp.pop %v1169
        %v1171 = vmul.f32 %v1166, %v1170
        %1172 = vrot.lane.b32.xlu0 %v354, 104
        %v1173 = vpop.permute.xlu0 %1172
        %v1176 = vsel %vm484, %v1171, 0
        %1178 = vmatprep.subr.mxu0 0.0
        %1179 = vmatpush1.msra.mxu0 %v1173
        %1180 = vmatprep.subr.mxu0 0.0
        %1181 = vmatpush1.msra.mxu0 0.0
        %1182 = vmatprep.subr.mxu0 0.0
        %1183 = vmatpush1.msra.mxu0 0.0
        %1184 = vmatprep.subr.mxu0 0.0
        %1185 = vmatpush1.msra.mxu0 0.0
        %1186 = vmatprep.subr.mxu0 0.0
        %1187 = vmatpush1.msra.mxu0 0.0
        %1188 = vmatprep.subr.mxu0 0.0
        %1189 = vmatpush1.msra.mxu0 0.0
        %1190 = vmatprep.subr.mxu0 0.0
        %1191 = vmatpush1.msra.mxu0 0.0
        %1192 = vmatprep.subr.mxu0 0.0
        %1193 = vmatpush1.msra.mxu0 0.0
        %1194 = vmatprep.subr.mxu0 0.0
        %1195 = vmatpush1.msra.mxu0 0.0
        %1196 = vmatprep.subr.mxu0 0.0
        %1197 = vmatpush1.msra.mxu0 0.0
        %1198 = vmatprep.subr.mxu0 0.0
        %1199 = vmatpush1.msra.mxu0 0.0
        %1200 = vmatprep.subr.mxu0 0.0
        %1201 = vmatpush1.msra.mxu0 0.0
        %1202 = vmatprep.subr.mxu0 0.0
        %1203 = vmatpush1.msra.mxu0 0.0
        %1204 = vmatprep.subr.mxu0 0.0
        %1205 = vmatpush1.msra.mxu0 0.0
        %1206 = vmatprep.subr.mxu0 0.0
        %1207 = vmatpush1.msra.mxu0 0.0
        %1208 = vmatprep.subr.mxu0 0.0
        %1209 = vmatpush1.msra.mxu0 0.0
        %1210 = vmatprep.subr.mxu0 0.0
        %1211 = vmatpush1.msra.mxu0 0.0
        %1212 = vmatprep.subr.mxu0 0.0
        %1213 = vmatpush1.msra.mxu0 0.0
        %1214 = vmatprep.subr.mxu0 0.0
        %1215 = vmatpush1.msra.mxu0 0.0
        %1216 = vmatprep.subr.mxu0 0.0
        %1217 = vmatpush1.msra.mxu0 0.0
        %1218 = vmatprep.subr.mxu0 0.0
        %1219 = vmatpush1.msra.mxu0 0.0
        %1220 = vmatprep.subr.mxu0 0.0
        %1221 = vmatpush1.msra.mxu0 0.0
        %1222 = vmatprep.subr.mxu0 0.0
        %1223 = vmatpush1.msra.mxu0 0.0
        %1224 = vmatprep.subr.mxu0 0.0
        %1225 = vmatpush1.msra.mxu0 0.0
        %1226 = vmatprep.subr.mxu0 0.0
        %1227 = vmatpush1.msra.mxu0 0.0
        %1228 = vmatprep.subr.mxu0 0.0
        %1229 = vmatpush1.msra.mxu0 0.0
        %1230 = vmatprep.subr.mxu0 0.0
        %1231 = vmatpush1.msra.mxu0 0.0
        %1232 = vmatprep.subr.mxu0 0.0
        %1233 = vmatpush1.msra.mxu0 0.0
        %1234 = vmatprep.subr.mxu0 0.0
        %1235 = vmatpush1.msra.mxu0 0.0
        %1236 = vmatprep.subr.mxu0 0.0
        %1237 = vmatpush1.msra.mxu0 0.0
        %1238 = vmatprep.subr.mxu0 0.0
        %1239 = vmatpush1.msra.mxu0 0.0
        %1240 = vmatprep.subr.mxu0 0.0
        %1241 = vmatpush1.msra.mxu0 0.0
        %1242 = vmatprep.mubr.f32.mxu0 0.0
        %1243 = vmatmul.mubr.f32.gmra.mrb[0].mxu0 %v1176
        %v1244 = vpop.f32.mrb[0].mxu0
        %v1245 = vadd.f32 0.0, %v1244
        %v1246 = vpop.f32.mrb[0].mxu0
        %1247 = vdwg.mxu0
        %v1248 = vld [vmem:[%s4] sm:$0xff]
        %v1249 = vld [vmem:[%s5] sm:$0x1]
        %v1251 = vlaneseq
        %v1252 = vshrl.u32 %v1251, 7
        %v1253 = vsub.s32 0, %v1252
        %v1254 = vrot.slane %v1249, %v1253
        %v1257 = vsel %vm484, %v1245, 0
        %1259 = vmatprep.subr.mxu0 0.0
        %1260 = vmatpush1.msra.mxu0 %v1248
        %1261 = vmatprep.subr.mxu0 0.0
        %1262 = vmatpush1.msra.mxu0 0.0
        %1263 = vmatprep.subr.mxu0 0.0
        %1264 = vmatpush1.msra.mxu0 0.0
        %1265 = vmatprep.subr.mxu0 0.0
        %1266 = vmatpush1.msra.mxu0 0.0
        %1267 = vmatprep.subr.mxu0 0.0
        %1268 = vmatpush1.msra.mxu0 0.0
        %1269 = vmatprep.subr.mxu0 0.0
        %1270 = vmatpush1.msra.mxu0 0.0
        %1271 = vmatprep.subr.mxu0 0.0
        %1272 = vmatpush1.msra.mxu0 0.0
        %1273 = vmatprep.subr.mxu0 0.0
        %1274 = vmatpush1.msra.mxu0 0.0
        %1275 = vmatprep.subr.mxu0 0.0
        %1276 = vmatpush1.msra.mxu0 0.0
        %1277 = vmatprep.subr.mxu0 0.0
        %1278 = vmatpush1.msra.mxu0 0.0
        %1279 = vmatprep.subr.mxu0 0.0
        %1280 = vmatpush1.msra.mxu0 0.0
        %1281 = vmatprep.subr.mxu0 0.0
        %1282 = vmatpush1.msra.mxu0 0.0
        %1283 = vmatprep.subr.mxu0 0.0
        %1284 = vmatpush1.msra.mxu0 0.0
        %1285 = vmatprep.subr.mxu0 0.0
        %1286 = vmatpush1.msra.mxu0 0.0
        %1287 = vmatprep.subr.mxu0 0.0
        %1288 = vmatpush1.msra.mxu0 0.0
        %1289 = vmatprep.subr.mxu0 0.0
        %1290 = vmatpush1.msra.mxu0 0.0
        %1291 = vmatprep.subr.mxu0 0.0
        %1292 = vmatpush1.msra.mxu0 0.0
        %1293 = vmatprep.subr.mxu0 0.0
        %1294 = vmatpush1.msra.mxu0 0.0
        %1295 = vmatprep.subr.mxu0 0.0
        %1296 = vmatpush1.msra.mxu0 0.0
        %1297 = vmatprep.subr.mxu0 0.0
        %1298 = vmatpush1.msra.mxu0 0.0
        %1299 = vmatprep.subr.mxu0 0.0
        %1300 = vmatpush1.msra.mxu0 0.0
        %1301 = vmatprep.subr.mxu0 0.0
        %1302 = vmatpush1.msra.mxu0 0.0
        %1303 = vmatprep.subr.mxu0 0.0
        %1304 = vmatpush1.msra.mxu0 0.0
        %1305 = vmatprep.subr.mxu0 0.0
        %1306 = vmatpush1.msra.mxu0 0.0
        %1307 = vmatprep.subr.mxu0 0.0
        %1308 = vmatpush1.msra.mxu0 0.0
        %1309 = vmatprep.subr.mxu0 0.0
        %1310 = vmatpush1.msra.mxu0 0.0
        %1311 = vmatprep.subr.mxu0 0.0
        %1312 = vmatpush1.msra.mxu0 0.0
        %1313 = vmatprep.subr.mxu0 0.0
        %1314 = vmatpush1.msra.mxu0 0.0
        %1315 = vmatprep.subr.mxu0 0.0
        %1316 = vmatpush1.msra.mxu0 0.0
        %1317 = vmatprep.subr.mxu0 0.0
        %1318 = vmatpush1.msra.mxu0 0.0
        %1319 = vmatprep.subr.mxu0 0.0
        %1320 = vmatpush1.msra.mxu0 0.0
        %1321 = vmatprep.subr.mxu0 0.0
        %1322 = vmatpush1.msra.mxu0 0.0
        %1323 = vmatprep.mubr.f32.mxu0 0.0
        %1324 = vmatmul.mubr.f32.gmra.mrb[0].mxu0 %v1257
        %v1325 = vpop.f32.mrb[0].mxu0
        %v1326 = vadd.f32 %v1254, %v1325
        %v1327 = vpop.f32.mrb[0].mxu0
        %1328 = vdwg.mxu0
        %v1329 = vsub.f32 0.0, %v1326
        %v1330 = vmul.f32 %v1329, 1.442695
        %v1331 = vpow.pop %v1330
        %v1332 = vadd.f32 %v1331, 1.0
        %v1333 = vrcp.pop %v1332
        %v1334 = vmul.f32 %v1245, %v1333
        %1336 = vrot.lane.b32.xlu0 %v1334, 24
        %v1337 = vpop.permute.xlu0 %1336
        %vm1339 = vcmask 261312
        %1340 = vst.msk [vmem:[%s270] sm:$0xff] %vm1339, %v1337
        %s1341 = sand.u32 %s165, 1
        %s1342 = scalar_lea.sflag [#allocation4], %s1341
        %s1343 = sand.u32 %s165, 1
        %s1344 = smul.addr %s1343, 8
        %s1345 = scalar_lea.vmem [#allocation5], %s1344
        // Predicated region
        $region49: #{tpu_custom_call.1} parent=43 // pred_check
          %p1346 = pneg %p175
        $region50: #{tpu_custom_call.1} parent=43 // pred_check_branch
          %1348 = sbr.rel (%p1346) target = $region52
        $region51: #{tpu_custom_call.1} parent=43 // pred_region
          %s1350 = ssub.s32 128, 128
          %1351 = vsyncadd %s1342, %s1350
          %s1352 = smul.addr %s21, 128
          %s1353 = scalar_lea.hbm %s6, %s1352
          %s1355 = sshll.u32 %s1345, 4
          %s1356 = int_to_ptr.vmem [resolvable:$true] %s1355
          %1358 = dma.vmem_to_hbm [thread:$0]  %s1356, 128, %s1353, %s1342
        $region52: #{tpu_custom_call.1} parent=43 // pred_fallthru
          _
      $region44: #{tpu_custom_call.1} parent=5 // pred_fallthru
        _
      %p1359 = scmp.le.s32.totalorder 2, %s16
      // Predicated region
      $region53: #{tpu_custom_call.1} parent=5 // pred_check
        %p1360 = pneg %p1359
      $region54: #{tpu_custom_call.1} parent=5 // pred_check_branch
        %1362 = sbr.rel (%p1360) target = $region56
      $region55: #{tpu_custom_call.1} parent=5 // pred_region
        %s1363 = ssub.s32 %s16, 2
        // Predicated region
        $region57: #{tpu_custom_call.1} parent=55 // pred_check
          %p1364 = pneg %p181
        $region58: #{tpu_custom_call.1} parent=55 // pred_check_branch
          %1366 = sbr.rel (%p1364) target = $region60
        $region59: #{tpu_custom_call.1} parent=55 // pred_region
          %s1367 = sand.u32 %s166, 1
          %s1368 = scalar_lea.sflag [#allocation4], %s1367
          %s1369 = sand.u32 %s166, 1
          %s1370 = smul.addr %s1369, 8
          %s1371 = scalar_lea.vmem [#allocation5], %s1370
          %1372 = dma.done %s1368, 128
        $region60: #{tpu_custom_call.1} parent=55 // pred_fallthru
          _
      $region56: #{tpu_custom_call.1} parent=5 // pred_fallthru
        _
    $region6: #{tpu_custom_call.1} parent=1 // loop_footer
      %s20 = sadd.s32 1, %s16
    $region7: #{tpu_custom_call.1} parent=1 // loop_footer_branch
      %15 = sbr.rel target = $region3
    $region8: #{tpu_custom_call.1} parent=1 // loop_exit
      _
    %1373 = vsyncpa [#allocation3], 1
    %s1374 = scalar_lea.sflag [#allocation3], 1
    %1375 = vsyncpa %s1374, 1
    %1376 = vsyncpa [#allocation4], 1
    %s1377 = scalar_lea.sflag [#allocation4], 1
    %1378 = vsyncpa %s1377, 1

</llo_original>
